<compile_context>
chip_gen: v7x
topology: tpu7x:2x2x1
jax: 0.10.0
libtpu: 0.0.40
codegen_flags: <defaults>
</compile_context>

<pallas_src>
import functools

import jax
import jax.numpy as jnp
import numpy as np
from jax.experimental import pallas as pl
from jax.experimental.pallas import tpu as pltpu

NEG_SLOPE = 0.2    # pt_utils.Conv2d activation used by RandGTNet (LeakyReLU 0.2)
LANE_TILE = 512    # points per block on the lane axis


def _round_up(x, m):
    return (x + m - 1) // m * m


# ----------------------------------------------------------------------------
# Fused Pallas kernel: fc -> softmax(K) -> weighted sum(K) -> mlp+bias+LeakyReLU
# ----------------------------------------------------------------------------
def _gt_pooling_kernel(x_ref, wfc_ref, wmlp_ref, bias_ref, o_ref, *, K, Cp):
    # x_ref:    (K*Cp, TL)   feature block, points on lanes
    # wfc_ref:  (K*Cp, K*Cp) block-diagonal I_K (x) W_fc   (VMEM-resident)
    # wmlp_ref: (Dp, Cp)     BN-scale-folded mlp weight    (VMEM-resident)
    # bias_ref: (Dp, 1)      folded BN bias                (VMEM-resident)
    # o_ref:    (Dp, TL)     lane-dense output block

    # fc:  att[k*Cp + d, m] = sum_c W_fc[d, c] * x[k*Cp + c, m]
    att = jnp.dot(wfc_ref[...], x_ref[...], preferred_element_type=jnp.float32)

    # Softmax over the K neighbour slabs (each slab = Cp sublanes, all lanes),
    # fused with the attention-weighted sum over K.  Pure VPU/EUP work on
    # fully dense vregs; K is small and statically unrolled.
    m = att[0:Cp, :]
    for k in range(1, K):
        m = jnp.maximum(m, att[k * Cp:(k + 1) * Cp, :])
    ssum = jnp.zeros_like(m)
    wsum = jnp.zeros_like(m)
    for k in range(K):
        e = jnp.exp(att[k * Cp:(k + 1) * Cp, :] - m)
        ssum = ssum + e
        wsum = wsum + x_ref[k * Cp:(k + 1) * Cp, :] * e
    f_agg = wsum / ssum                                        # (Cp, TL)

    # mlp (1x1 conv, BN scale pre-folded into the weights) + bias + LeakyReLU
    y = jnp.dot(wmlp_ref[...], f_agg, preferred_element_type=jnp.float32)
    y = y + bias_ref[...]                                      # (Dp,1) -> lanes
    o_ref[...] = jnp.where(y >= 0, y, NEG_SLOPE * y)


# ----------------------------------------------------------------------------
# Wrapper
# ----------------------------------------------------------------------------
def gt_pooling_forward(params, feature_set, neigh_idx=None):
    """GT_pooling.forward.  feature_set: [B, d_in, N, K] -> [B, d_out, N, 1]."""
    # TODO(synk): sparse_attention_centrality (scatter_add of att_scores over
    # neigh_idx) is computed by the PyTorch forward but never used by its
    # return value, so it is omitted here.
    del neigh_idx

    B, C, N, K = feature_set.shape
    w_fc = params["w_fc"]          # (d_in, d_in)
    w_mlp = params["w_mlp"]        # (d_out, d_in)
    bn_scale = params["bn_scale"]  # (d_out,)  folded inference BatchNorm
    bn_bias = params["bn_bias"]    # (d_out,)
    d_out = w_mlp.shape[0]

    Cp = _round_up(C, 8)           # f32 sublane tile
    Dp = _round_up(d_out, 8)
    M = B * N
    TL = min(LANE_TILE, _round_up(M, 128))
    Mp = _round_up(M, TL)
    KC = K * Cp

    # Host-side layout change (single transpose in / single transpose out):
    # [B, C, N, K] -> X[k*Cp + c, b*N + n]  (points lane-dense).
    x = jnp.transpose(feature_set, (3, 1, 0, 2)).reshape(K, C, M)
    x = jnp.pad(x, ((0, 0), (0, Cp - C), (0, Mp - M)))
    x = x.reshape(KC, Mp).astype(jnp.float32)

    # fc weight as block-diagonal I_K (x) W_fc -> one wide MXU contraction.
    wfc_p = jnp.pad(w_fc, ((0, Cp - C), (0, Cp - C))).astype(jnp.float32)
    wfc_big = jnp.kron(jnp.eye(K, dtype=jnp.float32), wfc_p)       # (KC, KC)
    # BN scale folded into the mlp weight; bias-only epilogue in the kernel.
    wmlp_p = jnp.pad(w_mlp * bn_scale[:, None],
                     ((0, Dp - d_out), (0, Cp - C))).astype(jnp.float32)
    bias_p = jnp.pad(bn_bias, (0, Dp - d_out)).astype(jnp.float32).reshape(Dp, 1)

    out = pl.pallas_call(
        functools.partial(_gt_pooling_kernel, K=K, Cp=Cp),
        out_shape=jax.ShapeDtypeStruct((Dp, Mp), jnp.float32),
        grid_spec=pltpu.PrefetchScalarGridSpec(
            num_scalar_prefetch=0,
            grid=(Mp // TL,),
            in_specs=[
                pl.BlockSpec((KC, TL), lambda i: (0, i)),   # activations
                pl.BlockSpec((KC, KC), lambda i: (0, 0)),   # fc weight (resident)
                pl.BlockSpec((Dp, Cp), lambda i: (0, 0)),   # mlp weight (resident)
                pl.BlockSpec((Dp, 1), lambda i: (0, 0)),    # bias (resident)
            ],
            out_specs=pl.BlockSpec((Dp, TL), lambda i: (0, i)),
        ),
        compiler_params=pltpu.CompilerParams(
            dimension_semantics=("parallel",)),
    )(x, wfc_big, wmlp_p, bias_p)

    out = out[:d_out, :M].reshape(d_out, B, N)
    return jnp.transpose(out, (1, 0, 2))[..., None]             # [B, d_out, N, 1]


# ----------------------------------------------------------------------------
# Pure-JAX reference (NCHW, mirrors the PyTorch module) and parameters
# ----------------------------------------------------------------------------
def gt_pooling_reference(params, feature_set):
    hp = jax.lax.Precision.HIGHEST
    att = jnp.einsum('dc,bcnk->bdnk', params["w_fc"], feature_set, precision=hp)
    att = jax.nn.softmax(att, axis=3)
    f_agg = jnp.sum(feature_set * att, axis=3, keepdims=True)
    y = jnp.einsum('dc,bcnk->bdnk', params["w_mlp"], f_agg, precision=hp)
    y = (y * params["bn_scale"][None, :, None, None]
         + params["bn_bias"][None, :, None, None])
    return jnp.where(y >= 0, y, NEG_SLOPE * y)


def make_gt_pooling_params(key, d_in, d_out):
    k1, k2 = jax.random.split(key)
    w_fc = jax.random.normal(k1, (d_in, d_in), jnp.float32) / np.sqrt(d_in)
    w_mlp = jax.random.normal(k2, (d_out, d_in), jnp.float32) / np.sqrt(d_in)
    # Inference-mode BatchNorm folded (gamma=1, beta=0, mean=0, var=1, eps=1e-5).
    bn_scale = jnp.full((d_out,), 1.0 / np.sqrt(1.0 + 1e-5), jnp.float32)
    bn_bias = jnp.zeros((d_out,), jnp.float32)
    return {"w_fc": w_fc, "w_mlp": w_mlp, "bn_scale": bn_scale, "bn_bias": bn_bias}


# ----------------------------------------------------------------------------
# Main
# ----------------------------------------------------------------------------
if __name__ == "__main__":
    B, d_in, N, K, d_out = 2, 8, 512, 16, 16

    key = jax.random.PRNGKey(0)
    kf, kp, ki = jax.random.split(key, 3)
    feature_set = jax.random.normal(kf, (B, d_in, N, K), jnp.float32)
    neigh_idx = jax.random.randint(ki, (B, N, K), 0, N, jnp.int32)  # unused by output
    params = make_gt_pooling_params(kp, d_in, d_out)

    fwd = jax.jit(gt_pooling_forward)
    out = jax.block_until_ready(fwd(params, feature_set, neigh_idx))

    assert out.shape == (B, d_out, N, 1), out.shape
    assert bool(jnp.all(jnp.isfinite(out)))

    ref = gt_pooling_reference(params, feature_set)
    max_err = float(jnp.max(jnp.abs(out - ref)))
    assert max_err < 2e-2, f"max abs error vs reference: {max_err}"

    print("KERNEL_OK")
</pallas_src>

<mosaic_0001>
module attributes {stable_mosaic.version = 11 : i64} {
  func.func @_gt_pooling_kernel(%arg0: i32, %arg1: memref<128x512xf32, #tpu.memory_space<vmem>>, %arg2: memref<128x128xf32, #tpu.memory_space<vmem>>, %arg3: memref<16x8xf32, #tpu.memory_space<vmem>>, %arg4: memref<16x1xf32, #tpu.memory_space<vmem>>, %arg5: memref<16x512xf32, #tpu.memory_space<vmem>>) attributes {dimension_semantics = [#tpu.dimension_semantics<parallel>], iteration_bounds = array<i64: 2>, scalar_prefetch = 0 : i64, scratch_operands = 0 : i64, tpu.core_type = #tpu.core_type<tc>, window_params = [{transform_indices = @transform_0, window_bounds = array<i64: 128, 512>}, {pipeline_mode = #tpu.pipeline_mode<synchronous>, transform_indices = @transform_1, window_bounds = array<i64: 128, 128>}, {pipeline_mode = #tpu.pipeline_mode<synchronous>, transform_indices = @transform_2, window_bounds = array<i64: 16, 8>}, {pipeline_mode = #tpu.pipeline_mode<synchronous>, transform_indices = @transform_3, window_bounds = array<i64: 16, 1>}, {transform_indices = @transform_4, window_bounds = array<i64: 16, 512>}]} {
    %c0 = arith.constant 0 : index
    %c0_0 = arith.constant 0 : index
    %0 = vector.load %arg2[%c0, %c0_0] : memref<128x128xf32, #tpu.memory_space<vmem>>, vector<128x128xf32>
    %c0_1 = arith.constant 0 : index
    %c0_2 = arith.constant 0 : index
    %1 = vector.load %arg1[%c0_1, %c0_2] : memref<128x512xf32, #tpu.memory_space<vmem>>, vector<128x512xf32>
    %cst = arith.constant dense<0.000000e+00> : vector<128x512xf32>
    %2 = tpu.matmul %0, %1, %cst {dimension_numbers = #tpu.dot_dimension_numbers<[1], [0], [0], [1], [0, 0, 1, 1], [], []>} : vector<128x128xf32>, vector<128x512xf32>, vector<128x512xf32> -> vector<128x512xf32>
    %3 = vector.extract_strided_slice %2 {offsets = [0, 0], sizes = [8, 512], strides = [1, 1]} : vector<128x512xf32> to vector<8x512xf32>
    %4 = vector.extract_strided_slice %2 {offsets = [8, 0], sizes = [8, 512], strides = [1, 1]} : vector<128x512xf32> to vector<8x512xf32>
    %5 = arith.maximumf %3, %4 : vector<8x512xf32>
    %6 = vector.extract_strided_slice %2 {offsets = [16, 0], sizes = [8, 512], strides = [1, 1]} : vector<128x512xf32> to vector<8x512xf32>
    %7 = arith.maximumf %5, %6 : vector<8x512xf32>
    %8 = vector.extract_strided_slice %2 {offsets = [24, 0], sizes = [8, 512], strides = [1, 1]} : vector<128x512xf32> to vector<8x512xf32>
    %9 = arith.maximumf %7, %8 : vector<8x512xf32>
    %10 = vector.extract_strided_slice %2 {offsets = [32, 0], sizes = [8, 512], strides = [1, 1]} : vector<128x512xf32> to vector<8x512xf32>
    %11 = arith.maximumf %9, %10 : vector<8x512xf32>
    %12 = vector.extract_strided_slice %2 {offsets = [40, 0], sizes = [8, 512], strides = [1, 1]} : vector<128x512xf32> to vector<8x512xf32>
    %13 = arith.maximumf %11, %12 : vector<8x512xf32>
    %14 = vector.extract_strided_slice %2 {offsets = [48, 0], sizes = [8, 512], strides = [1, 1]} : vector<128x512xf32> to vector<8x512xf32>
    %15 = arith.maximumf %13, %14 : vector<8x512xf32>
    %16 = vector.extract_strided_slice %2 {offsets = [56, 0], sizes = [8, 512], strides = [1, 1]} : vector<128x512xf32> to vector<8x512xf32>
    %17 = arith.maximumf %15, %16 : vector<8x512xf32>
    %18 = vector.extract_strided_slice %2 {offsets = [64, 0], sizes = [8, 512], strides = [1, 1]} : vector<128x512xf32> to vector<8x512xf32>
    %19 = arith.maximumf %17, %18 : vector<8x512xf32>
    %20 = vector.extract_strided_slice %2 {offsets = [72, 0], sizes = [8, 512], strides = [1, 1]} : vector<128x512xf32> to vector<8x512xf32>
    %21 = arith.maximumf %19, %20 : vector<8x512xf32>
    %22 = vector.extract_strided_slice %2 {offsets = [80, 0], sizes = [8, 512], strides = [1, 1]} : vector<128x512xf32> to vector<8x512xf32>
    %23 = arith.maximumf %21, %22 : vector<8x512xf32>
    %24 = vector.extract_strided_slice %2 {offsets = [88, 0], sizes = [8, 512], strides = [1, 1]} : vector<128x512xf32> to vector<8x512xf32>
    %25 = arith.maximumf %23, %24 : vector<8x512xf32>
    %26 = vector.extract_strided_slice %2 {offsets = [96, 0], sizes = [8, 512], strides = [1, 1]} : vector<128x512xf32> to vector<8x512xf32>
    %27 = arith.maximumf %25, %26 : vector<8x512xf32>
    %28 = vector.extract_strided_slice %2 {offsets = [104, 0], sizes = [8, 512], strides = [1, 1]} : vector<128x512xf32> to vector<8x512xf32>
    %29 = arith.maximumf %27, %28 : vector<8x512xf32>
    %30 = vector.extract_strided_slice %2 {offsets = [112, 0], sizes = [8, 512], strides = [1, 1]} : vector<128x512xf32> to vector<8x512xf32>
    %31 = arith.maximumf %29, %30 : vector<8x512xf32>
    %32 = vector.extract_strided_slice %2 {offsets = [120, 0], sizes = [8, 512], strides = [1, 1]} : vector<128x512xf32> to vector<8x512xf32>
    %33 = arith.maximumf %31, %32 : vector<8x512xf32>
    %cst_3 = arith.constant 0.000000e+00 : f32
    %34 = vector.broadcast %cst_3 : f32 to vector<8x512xf32>
    %cst_4 = arith.constant 0.000000e+00 : f32
    %35 = vector.broadcast %cst_4 : f32 to vector<8x512xf32>
    %36 = vector.extract_strided_slice %2 {offsets = [0, 0], sizes = [8, 512], strides = [1, 1]} : vector<128x512xf32> to vector<8x512xf32>
    %37 = arith.subf %36, %33 : vector<8x512xf32>
    %38 = math.exp %37 : vector<8x512xf32>
    %39 = arith.addf %34, %38 : vector<8x512xf32>
    %c0_5 = arith.constant 0 : index
    %c0_6 = arith.constant 0 : index
    %40 = vector.load %arg1[%c0_5, %c0_6] : memref<128x512xf32, #tpu.memory_space<vmem>>, vector<8x512xf32>
    %41 = arith.mulf %40, %38 : vector<8x512xf32>
    %42 = arith.addf %35, %41 : vector<8x512xf32>
    %43 = vector.extract_strided_slice %2 {offsets = [8, 0], sizes = [8, 512], strides = [1, 1]} : vector<128x512xf32> to vector<8x512xf32>
    %44 = arith.subf %43, %33 : vector<8x512xf32>
    %45 = math.exp %44 : vector<8x512xf32>
    %46 = arith.addf %39, %45 : vector<8x512xf32>
    %c8 = arith.constant 8 : index
    %c0_7 = arith.constant 0 : index
    %47 = vector.load %arg1[%c8, %c0_7] : memref<128x512xf32, #tpu.memory_space<vmem>>, vector<8x512xf32>
    %48 = arith.mulf %47, %45 : vector<8x512xf32>
    %49 = arith.addf %42, %48 : vector<8x512xf32>
    %50 = vector.extract_strided_slice %2 {offsets = [16, 0], sizes = [8, 512], strides = [1, 1]} : vector<128x512xf32> to vector<8x512xf32>
    %51 = arith.subf %50, %33 : vector<8x512xf32>
    %52 = math.exp %51 : vector<8x512xf32>
    %53 = arith.addf %46, %52 : vector<8x512xf32>
    %c16 = arith.constant 16 : index
    %c0_8 = arith.constant 0 : index
    %54 = vector.load %arg1[%c16, %c0_8] : memref<128x512xf32, #tpu.memory_space<vmem>>, vector<8x512xf32>
    %55 = arith.mulf %54, %52 : vector<8x512xf32>
    %56 = arith.addf %49, %55 : vector<8x512xf32>
    %57 = vector.extract_strided_slice %2 {offsets = [24, 0], sizes = [8, 512], strides = [1, 1]} : vector<128x512xf32> to vector<8x512xf32>
    %58 = arith.subf %57, %33 : vector<8x512xf32>
    %59 = math.exp %58 : vector<8x512xf32>
    %60 = arith.addf %53, %59 : vector<8x512xf32>
    %c24 = arith.constant 24 : index
    %c0_9 = arith.constant 0 : index
    %61 = vector.load %arg1[%c24, %c0_9] : memref<128x512xf32, #tpu.memory_space<vmem>>, vector<8x512xf32>
    %62 = arith.mulf %61, %59 : vector<8x512xf32>
    %63 = arith.addf %56, %62 : vector<8x512xf32>
    %64 = vector.extract_strided_slice %2 {offsets = [32, 0], sizes = [8, 512], strides = [1, 1]} : vector<128x512xf32> to vector<8x512xf32>
    %65 = arith.subf %64, %33 : vector<8x512xf32>
    %66 = math.exp %65 : vector<8x512xf32>
    %67 = arith.addf %60, %66 : vector<8x512xf32>
    %c32 = arith.constant 32 : index
    %c0_10 = arith.constant 0 : index
    %68 = vector.load %arg1[%c32, %c0_10] : memref<128x512xf32, #tpu.memory_space<vmem>>, vector<8x512xf32>
    %69 = arith.mulf %68, %66 : vector<8x512xf32>
    %70 = arith.addf %63, %69 : vector<8x512xf32>
    %71 = vector.extract_strided_slice %2 {offsets = [40, 0], sizes = [8, 512], strides = [1, 1]} : vector<128x512xf32> to vector<8x512xf32>
    %72 = arith.subf %71, %33 : vector<8x512xf32>
    %73 = math.exp %72 : vector<8x512xf32>
    %74 = arith.addf %67, %73 : vector<8x512xf32>
    %c40 = arith.constant 40 : index
    %c0_11 = arith.constant 0 : index
    %75 = vector.load %arg1[%c40, %c0_11] : memref<128x512xf32, #tpu.memory_space<vmem>>, vector<8x512xf32>
    %76 = arith.mulf %75, %73 : vector<8x512xf32>
    %77 = arith.addf %70, %76 : vector<8x512xf32>
    %78 = vector.extract_strided_slice %2 {offsets = [48, 0], sizes = [8, 512], strides = [1, 1]} : vector<128x512xf32> to vector<8x512xf32>
    %79 = arith.subf %78, %33 : vector<8x512xf32>
    %80 = math.exp %79 : vector<8x512xf32>
    %81 = arith.addf %74, %80 : vector<8x512xf32>
    %c48 = arith.constant 48 : index
    %c0_12 = arith.constant 0 : index
    %82 = vector.load %arg1[%c48, %c0_12] : memref<128x512xf32, #tpu.memory_space<vmem>>, vector<8x512xf32>
    %83 = arith.mulf %82, %80 : vector<8x512xf32>
    %84 = arith.addf %77, %83 : vector<8x512xf32>
    %85 = vector.extract_strided_slice %2 {offsets = [56, 0], sizes = [8, 512], strides = [1, 1]} : vector<128x512xf32> to vector<8x512xf32>
    %86 = arith.subf %85, %33 : vector<8x512xf32>
    %87 = math.exp %86 : vector<8x512xf32>
    %88 = arith.addf %81, %87 : vector<8x512xf32>
    %c56 = arith.constant 56 : index
    %c0_13 = arith.constant 0 : index
    %89 = vector.load %arg1[%c56, %c0_13] : memref<128x512xf32, #tpu.memory_space<vmem>>, vector<8x512xf32>
    %90 = arith.mulf %89, %87 : vector<8x512xf32>
    %91 = arith.addf %84, %90 : vector<8x512xf32>
    %92 = vector.extract_strided_slice %2 {offsets = [64, 0], sizes = [8, 512], strides = [1, 1]} : vector<128x512xf32> to vector<8x512xf32>
    %93 = arith.subf %92, %33 : vector<8x512xf32>
    %94 = math.exp %93 : vector<8x512xf32>
    %95 = arith.addf %88, %94 : vector<8x512xf32>
    %c64 = arith.constant 64 : index
    %c0_14 = arith.constant 0 : index
    %96 = vector.load %arg1[%c64, %c0_14] : memref<128x512xf32, #tpu.memory_space<vmem>>, vector<8x512xf32>
    %97 = arith.mulf %96, %94 : vector<8x512xf32>
    %98 = arith.addf %91, %97 : vector<8x512xf32>
    %99 = vector.extract_strided_slice %2 {offsets = [72, 0], sizes = [8, 512], strides = [1, 1]} : vector<128x512xf32> to vector<8x512xf32>
    %100 = arith.subf %99, %33 : vector<8x512xf32>
    %101 = math.exp %100 : vector<8x512xf32>
    %102 = arith.addf %95, %101 : vector<8x512xf32>
    %c72 = arith.constant 72 : index
    %c0_15 = arith.constant 0 : index
    %103 = vector.load %arg1[%c72, %c0_15] : memref<128x512xf32, #tpu.memory_space<vmem>>, vector<8x512xf32>
    %104 = arith.mulf %103, %101 : vector<8x512xf32>
    %105 = arith.addf %98, %104 : vector<8x512xf32>
    %106 = vector.extract_strided_slice %2 {offsets = [80, 0], sizes = [8, 512], strides = [1, 1]} : vector<128x512xf32> to vector<8x512xf32>
    %107 = arith.subf %106, %33 : vector<8x512xf32>
    %108 = math.exp %107 : vector<8x512xf32>
    %109 = arith.addf %102, %108 : vector<8x512xf32>
    %c80 = arith.constant 80 : index
    %c0_16 = arith.constant 0 : index
    %110 = vector.load %arg1[%c80, %c0_16] : memref<128x512xf32, #tpu.memory_space<vmem>>, vector<8x512xf32>
    %111 = arith.mulf %110, %108 : vector<8x512xf32>
    %112 = arith.addf %105, %111 : vector<8x512xf32>
    %113 = vector.extract_strided_slice %2 {offsets = [88, 0], sizes = [8, 512], strides = [1, 1]} : vector<128x512xf32> to vector<8x512xf32>
    %114 = arith.subf %113, %33 : vector<8x512xf32>
    %115 = math.exp %114 : vector<8x512xf32>
    %116 = arith.addf %109, %115 : vector<8x512xf32>
    %c88 = arith.constant 88 : index
    %c0_17 = arith.constant 0 : index
    %117 = vector.load %arg1[%c88, %c0_17] : memref<128x512xf32, #tpu.memory_space<vmem>>, vector<8x512xf32>
    %118 = arith.mulf %117, %115 : vector<8x512xf32>
    %119 = arith.addf %112, %118 : vector<8x512xf32>
    %120 = vector.extract_strided_slice %2 {offsets = [96, 0], sizes = [8, 512], strides = [1, 1]} : vector<128x512xf32> to vector<8x512xf32>
    %121 = arith.subf %120, %33 : vector<8x512xf32>
    %122 = math.exp %121 : vector<8x512xf32>
    %123 = arith.addf %116, %122 : vector<8x512xf32>
    %c96 = arith.constant 96 : index
    %c0_18 = arith.constant 0 : index
    %124 = vector.load %arg1[%c96, %c0_18] : memref<128x512xf32, #tpu.memory_space<vmem>>, vector<8x512xf32>
    %125 = arith.mulf %124, %122 : vector<8x512xf32>
    %126 = arith.addf %119, %125 : vector<8x512xf32>
    %127 = vector.extract_strided_slice %2 {offsets = [104, 0], sizes = [8, 512], strides = [1, 1]} : vector<128x512xf32> to vector<8x512xf32>
    %128 = arith.subf %127, %33 : vector<8x512xf32>
    %129 = math.exp %128 : vector<8x512xf32>
    %130 = arith.addf %123, %129 : vector<8x512xf32>
    %c104 = arith.constant 104 : index
    %c0_19 = arith.constant 0 : index
    %131 = vector.load %arg1[%c104, %c0_19] : memref<128x512xf32, #tpu.memory_space<vmem>>, vector<8x512xf32>
    %132 = arith.mulf %131, %129 : vector<8x512xf32>
    %133 = arith.addf %126, %132 : vector<8x512xf32>
    %134 = vector.extract_strided_slice %2 {offsets = [112, 0], sizes = [8, 512], strides = [1, 1]} : vector<128x512xf32> to vector<8x512xf32>
    %135 = arith.subf %134, %33 : vector<8x512xf32>
    %136 = math.exp %135 : vector<8x512xf32>
    %137 = arith.addf %130, %136 : vector<8x512xf32>
    %c112 = arith.constant 112 : index
    %c0_20 = arith.constant 0 : index
    %138 = vector.load %arg1[%c112, %c0_20] : memref<128x512xf32, #tpu.memory_space<vmem>>, vector<8x512xf32>
    %139 = arith.mulf %138, %136 : vector<8x512xf32>
    %140 = arith.addf %133, %139 : vector<8x512xf32>
    %141 = vector.extract_strided_slice %2 {offsets = [120, 0], sizes = [8, 512], strides = [1, 1]} : vector<128x512xf32> to vector<8x512xf32>
    %142 = arith.subf %141, %33 : vector<8x512xf32>
    %143 = math.exp %142 : vector<8x512xf32>
    %144 = arith.addf %137, %143 : vector<8x512xf32>
    %c120 = arith.constant 120 : index
    %c0_21 = arith.constant 0 : index
    %145 = vector.load %arg1[%c120, %c0_21] : memref<128x512xf32, #tpu.memory_space<vmem>>, vector<8x512xf32>
    %146 = arith.mulf %145, %143 : vector<8x512xf32>
    %147 = arith.addf %140, %146 : vector<8x512xf32>
    %148 = arith.divf %147, %144 : vector<8x512xf32>
    %c0_22 = arith.constant 0 : index
    %c0_23 = arith.constant 0 : index
    %149 = vector.load %arg3[%c0_22, %c0_23] : memref<16x8xf32, #tpu.memory_space<vmem>>, vector<16x8xf32>
    %cst_24 = arith.constant dense<0.000000e+00> : vector<16x512xf32>
    %150 = tpu.matmul %149, %148, %cst_24 {dimension_numbers = #tpu.dot_dimension_numbers<[1], [0], [0], [1], [0, 0, 1, 1], [], []>} : vector<16x8xf32>, vector<8x512xf32>, vector<16x512xf32> -> vector<16x512xf32>
    %c0_25 = arith.constant 0 : index
    %c0_26 = arith.constant 0 : index
    %151 = vector.load %arg4[%c0_25, %c0_26] : memref<16x1xf32, #tpu.memory_space<vmem>>, vector<16x1xf32>
    %152 = vector.broadcast %151 : vector<16x1xf32> to vector<16x512xf32>
    %153 = arith.addf %150, %152 : vector<16x512xf32>
    %cst_27 = arith.constant 0.000000e+00 : f32
    %154 = vector.broadcast %cst_27 : f32 to vector<16x512xf32>
    %155 = arith.cmpf oge, %153, %154 : vector<16x512xf32>
    %cst_28 = arith.constant 2.000000e-01 : f32
    %156 = vector.broadcast %cst_28 : f32 to vector<16x512xf32>
    %157 = arith.mulf %156, %153 : vector<16x512xf32>
    %158 = arith.select %155, %153, %157 : vector<16x512xi1>, vector<16x512xf32>
    %c0_29 = arith.constant 0 : index
    %c0_30 = arith.constant 0 : index
    %159 = vector.load %arg5[%c0_29, %c0_30] : memref<16x512xf32, #tpu.memory_space<vmem>>, vector<16x512xf32>
    tpu.vector_store %arg5[%c0_29, %c0_30], %158 {strides = array<i32>} : memref<16x512xf32, #tpu.memory_space<vmem>>, vector<16x512xf32>,
    return
  }
  func.func @transform_0(%arg0: i32) -> (i32, i32) {
    %c0_i32 = arith.constant 0 : i32
    %c0_i32_0 = arith.constant 0 : i32
    return %c0_i32, %arg0 : i32, i32
  }
  func.func @transform_1(%arg0: i32) -> (i32, i32) {
    %c0_i32 = arith.constant 0 : i32
    %c0_i32_0 = arith.constant 0 : i32
    %c0_i32_1 = arith.constant 0 : i32
    return %c0_i32, %c0_i32_0 : i32, i32
  }
  func.func @transform_2(%arg0: i32) -> (i32, i32) {
    %c0_i32 = arith.constant 0 : i32
    %c0_i32_0 = arith.constant 0 : i32
    %c0_i32_1 = arith.constant 0 : i32
    return %c0_i32, %c0_i32_0 : i32, i32
  }
  func.func @transform_3(%arg0: i32) -> (i32, i32) {
    %c0_i32 = arith.constant 0 : i32
    %c0_i32_0 = arith.constant 0 : i32
    %c0_i32_1 = arith.constant 0 : i32
    return %c0_i32, %c0_i32_0 : i32, i32
  }
  func.func @transform_4(%arg0: i32) -> (i32, i32) {
    %c0_i32 = arith.constant 0 : i32
    %c0_i32_0 = arith.constant 0 : i32
    return %c0_i32, %arg0 : i32, i32
  }
}

</mosaic_0001>

<llo_original>
// kernel: gt_pooling_forward.1
$region0: #{gt_pooling_forward.1}
  #allocation0 [shape = 'u32[]', space=smem, size = 0x4, offset = 0x4, fixed_abs, tag = 'smem constant byte address 0x4 - core index']
  #allocation1 [shape = 'u32[144,128]{1,0:T(1,128)}', space=vmem, size = 0x12000, scoped, tag = 'internal scratch']
  %s0 = inlined_call_operand.vmem [shape: f32[128,1024], index: 0, kind: input, shape index: {}]
  %s1 = inlined_call_operand.vmem [shape: f32[128,128], index: 1, kind: input, shape index: {}]
  %s2 = inlined_call_operand.vmem [shape: f32[16,8], index: 2, kind: input, shape index: {}]
  %s3 = inlined_call_operand.vmem [shape: f32[16,1], index: 3, kind: input, shape index: {}]
  %s4 = inlined_call_operand.vmem [shape: f32[16,1024], index: 4, kind: output, shape index: {}]
  %s5 = sld [smem:[#allocation0]]
  $region91: #{gt_pooling_forward.1} parent=0
    _
  %s7 = ssub.s32 1, %s5
  %s8 = scalar_select 0, %s7, %s5
  $region1: #{gt_pooling_forward.1} parent=0
    #allocation2 [shape = 'u8[524288]{0}', space=vmem, size = 0x80000, scoped, tag = 'input window, operand 0']
    #allocation3 [shape = 'u8[65536]{0}', space=vmem, size = 0x10000, scoped, tag = 'output window, operand 0']
    loop: start=0, step=1, limit=4
    $region2: #{gt_pooling_forward.1} parent=1 // loop_pre_header
      _
    $region3: #{gt_pooling_forward.1} parent=1 // loop_header
      %s10 = sphi 0, %s14
      %p11 = scmp.ge.s32.totalorder %s10, 4
      %s20 = sphi 0, %s22
      %s23 = sphi 0, %s20
      %s24 = sphi 0, %s23
      %s40 = sphi 0, %s24
      %s44 = sphi 0, %s44
      %s46 = sphi 0, %s44
      %s47 = sphi 0, %s46
      %s61 = sphi 0, %s47
      %s65 = sphi 0, %s65
      %s67 = sphi 0, %s65
      %s68 = sphi 0, %s67
      %s82 = sphi 0, %s68
      %s86 = sphi 0, %s86
      %s88 = sphi 0, %s86
      %s89 = sphi 0, %s88
      %s103 = sphi 0, %s89
      %s109 = sphi 0, %s111
      %s112 = sphi 0, %s109
      %s113 = sphi 0, %s112
      %s129 = sphi 0, %s113
    $region4: #{gt_pooling_forward.1} parent=1 // loop_header_branch
      %13 = sbr.rel (%p11) target = $region8
    $region5: #{gt_pooling_forward.1} parent=1 // loop_body
      %s15 = ssub.s32 %s10, 1
      %s16 = ssub.s32 %s10, 2
      %s17 = sadd.s32 %s10, 1
      %s18 = ssub.s32 %s10, %s17
      %p19 = scmp.eq.s32.totalorder %s18, 0
      %s21 = sadd.s32 %s20, 1
      %s22 = scalar_select %p19, %s20, %s21
      %p25 = pneg %p19
      %p26 = scmp.eq.s32.totalorder %s10, 1
      %p27 = por %p25, %p26
      %p28 = scmp.ne.s32.totalorder %s20, %s23
      %p29 = scmp.eq.s32.totalorder %s10, 0
      %p30 = por %p28, %p29
      %p31 = scmp.ne.s32.totalorder %s20, %s23
      %p32 = scmp.eq.s32.totalorder %s15, 1
      %p33 = por %p31, %p32
      %p34 = scmp.ne.s32.totalorder %s23, %s24
      %p35 = scmp.eq.s32.totalorder %s15, 0
      %p36 = por %p34, %p35
      %p37 = scmp.ne.s32.totalorder %s23, %s24
      %p38 = scmp.eq.s32.totalorder %s16, 1
      %p39 = por %p37, %p38
      %p41 = scmp.ne.s32.totalorder %s24, %s40
      %p42 = scmp.eq.s32.totalorder %s16, 0
      %p43 = por %p41, %p42
      %s45 = sadd.s32 %s44, 1
      %p48 = scmp.eq.s32.totalorder %s10, 1
      %p49 = scmp.ne.s32.totalorder %s44, %s46
      %p50 = scmp.eq.s32.totalorder %s10, 0
      %p51 = por %p49, %p50
      %p52 = scmp.ne.s32.totalorder %s44, %s46
      %p53 = scmp.eq.s32.totalorder %s15, 1
      %p54 = por %p52, %p53
      %p55 = scmp.ne.s32.totalorder %s46, %s47
      %p56 = scmp.eq.s32.totalorder %s15, 0
      %p57 = por %p55, %p56
      %p58 = scmp.ne.s32.totalorder %s46, %s47
      %p59 = scmp.eq.s32.totalorder %s16, 1
      %p60 = por %p58, %p59
      %p62 = scmp.ne.s32.totalorder %s47, %s61
      %p63 = scmp.eq.s32.totalorder %s16, 0
      %p64 = por %p62, %p63
      %s66 = sadd.s32 %s65, 1
      %p69 = scmp.eq.s32.totalorder %s10, 1
      %p70 = scmp.ne.s32.totalorder %s65, %s67
      %p71 = scmp.eq.s32.totalorder %s10, 0
      %p72 = por %p70, %p71
      %p73 = scmp.ne.s32.totalorder %s65, %s67
      %p74 = scmp.eq.s32.totalorder %s15, 1
      %p75 = por %p73, %p74
      %p76 = scmp.ne.s32.totalorder %s67, %s68
      %p77 = scmp.eq.s32.totalorder %s15, 0
      %p78 = por %p76, %p77
      %p79 = scmp.ne.s32.totalorder %s67, %s68
      %p80 = scmp.eq.s32.totalorder %s16, 1
      %p81 = por %p79, %p80
      %p83 = scmp.ne.s32.totalorder %s68, %s82
      %p84 = scmp.eq.s32.totalorder %s16, 0
      %p85 = por %p83, %p84
      %s87 = sadd.s32 %s86, 1
      %p90 = scmp.eq.s32.totalorder %s10, 1
      %p91 = scmp.ne.s32.totalorder %s86, %s88
      %p92 = scmp.eq.s32.totalorder %s10, 0
      %p93 = por %p91, %p92
      %p94 = scmp.ne.s32.totalorder %s86, %s88
      %p95 = scmp.eq.s32.totalorder %s15, 1
      %p96 = por %p94, %p95
      %p97 = scmp.ne.s32.totalorder %s88, %s89
      %p98 = scmp.eq.s32.totalorder %s15, 0
      %p99 = por %p97, %p98
      %p100 = scmp.ne.s32.totalorder %s88, %s89
      %p101 = scmp.eq.s32.totalorder %s16, 1
      %p102 = por %p100, %p101
      %p104 = scmp.ne.s32.totalorder %s89, %s103
      %p105 = scmp.eq.s32.totalorder %s16, 0
      %p106 = por %p104, %p105
      %s107 = ssub.s32 %s10, %s17
      %p108 = scmp.eq.s32.totalorder %s107, 0
      %s110 = sadd.s32 %s109, 1
      %s111 = scalar_select %p108, %s109, %s110
      %p114 = pneg %p108
      %p115 = scmp.eq.s32.totalorder %s10, 1
      %p116 = por %p114, %p115
      %p117 = scmp.ne.s32.totalorder %s109, %s112
      %p118 = scmp.eq.s32.totalorder %s10, 0
      %p119 = por %p117, %p118
      %p120 = scmp.ne.s32.totalorder %s109, %s112
      %p121 = scmp.eq.s32.totalorder %s15, 1
      %p122 = por %p120, %p121
      %p123 = scmp.ne.s32.totalorder %s112, %s113
      %p124 = scmp.eq.s32.totalorder %s15, 0
      %p125 = por %p123, %p124
      %p126 = scmp.ne.s32.totalorder %s112, %s113
      %p127 = scmp.eq.s32.totalorder %s16, 1
      %p128 = por %p126, %p127
      %p130 = scmp.ne.s32.totalorder %s113, %s129
      %p131 = scmp.eq.s32.totalorder %s16, 0
      %p132 = por %p130, %p131
      %p133 = scmp.le.s32.totalorder 1, %s10
      %p134 = scmp.lt.s32.totalorder %s10, 3
      %p135 = pnand %p133, %p134
      %p136 = pneg %p135
      // Predicated region
      $region9: #{gt_pooling_forward.1} parent=5 // pred_check
        _
      $region10: #{gt_pooling_forward.1} parent=5 // pred_check_branch
        %138 = sbr.rel (%p135) target = $region12
      $region11: #{gt_pooling_forward.1} parent=5 // pred_region
        %s139 = ssub.s32 %s10, 1
        // Predicated region
        $region13: #{gt_pooling_forward.1} parent=11 // pred_check
          %p140 = pneg %p57
        $region14: #{gt_pooling_forward.1} parent=11 // pred_check_branch
          %142 = sbr.rel (%p140) target = $region16
        $region15: #{gt_pooling_forward.1} parent=11 // pred_region
          _
        $region16: #{gt_pooling_forward.1} parent=11 // pred_fallthru
          _
        // Predicated region
        $region17: #{gt_pooling_forward.1} parent=11 // pred_check
          %p143 = pneg %p78
        $region18: #{gt_pooling_forward.1} parent=11 // pred_check_branch
          %145 = sbr.rel (%p143) target = $region20
        $region19: #{gt_pooling_forward.1} parent=11 // pred_region
          _
        $region20: #{gt_pooling_forward.1} parent=11 // pred_fallthru
          _
        // Predicated region
        $region21: #{gt_pooling_forward.1} parent=11 // pred_check
          %p146 = pneg %p99
        $region22: #{gt_pooling_forward.1} parent=11 // pred_check_branch
          %148 = sbr.rel (%p146) target = $region24
        $region23: #{gt_pooling_forward.1} parent=11 // pred_region
          _
        $region24: #{gt_pooling_forward.1} parent=11 // pred_fallthru
          _
      $region12: #{gt_pooling_forward.1} parent=5 // pred_fallthru
        _
      %p149 = scmp.lt.s32.totalorder %s10, 2
      // Predicated region
      $region25: #{gt_pooling_forward.1} parent=5 // pred_check
        %p150 = pneg %p149
      $region26: #{gt_pooling_forward.1} parent=5 // pred_check_branch
        %152 = sbr.rel (%p150) target = $region28
      $region27: #{gt_pooling_forward.1} parent=5 // pred_region
        // Predicated region
        $region29: #{gt_pooling_forward.1} parent=27 // pred_check
          %p153 = pneg %p30
        $region30: #{gt_pooling_forward.1} parent=27 // pred_check_branch
          %155 = sbr.rel (%p153) target = $region32
        $region31: #{gt_pooling_forward.1} parent=27 // pred_region
          %s156 = sand.u32 %s20, 1
          %s157 = sand.u32 %s20, 1
          %s158 = smul.addr %s157, 512
          %s159 = scalar_lea.vmem [#allocation2], %s158
          %s160 = smul.u32 4, %s10
          %s161 = smul.addr %s160, 8
          %s162 = scalar_lea.vmem %s0, %s161
          // Predicated region
          $region33: #{gt_pooling_forward.1} parent=31 // pred_check
            _
          $region34: #{gt_pooling_forward.1} parent=31 // pred_check_branch
            %164 = sbr.rel (0) target = $region36
          $region35: #{gt_pooling_forward.1} parent=31 // pred_region
            // Predicated region
            $region37: #{gt_pooling_forward.1} parent=35 // pred_check
              _
            $region38: #{gt_pooling_forward.1} parent=35 // pred_check_branch
              %166 = sbr.rel (0) target = $region40
            $region39: #{gt_pooling_forward.1} parent=35 // pred_region
              loop: start=0, step=1, limit=1
              $region41: #{gt_pooling_forward.1} parent=39 // loop_pre_header
                _
              $region42: #{gt_pooling_forward.1} parent=39 // loop_header
                %s168 = sphi 0, %s172
                %p169 = scmp.ge.s32.totalorder %s168, 1
                %s173 = sphi %s162, %s162
                %s174 = sphi %s159, %s159
              $region43: #{gt_pooling_forward.1} parent=39 // loop_header_branch
                %171 = sbr.rel (%p169) target = $region47
              $region44: #{gt_pooling_forward.1} parent=39 // loop_body
                %v175 = vld [vmem:[%s173] sm:$0xff]
                %176 = vst [vmem:[%s174] sm:$0xff] %v175
                %v177 = vld [vmem:[%s173 + $0x8] sm:$0xff]
                %178 = vst [vmem:[%s174 + $0x8] sm:$0xff] %v177
                %v179 = vld [vmem:[%s173 + $0x10] sm:$0xff]
                %180 = vst [vmem:[%s174 + $0x10] sm:$0xff] %v179
                %v181 = vld [vmem:[%s173 + $0x18] sm:$0xff]
                %182 = vst [vmem:[%s174 + $0x18] sm:$0xff] %v181
                %v183 = vld [vmem:[%s173 + $0x40] sm:$0xff]
                %184 = vst [vmem:[%s174 + $0x20] sm:$0xff] %v183
                %v185 = vld [vmem:[%s173 + $0x48] sm:$0xff]
                %186 = vst [vmem:[%s174 + $0x28] sm:$0xff] %v185
                %v187 = vld [vmem:[%s173 + $0x50] sm:$0xff]
                %188 = vst [vmem:[%s174 + $0x30] sm:$0xff] %v187
                %v189 = vld [vmem:[%s173 + $0x58] sm:$0xff]
                %190 = vst [vmem:[%s174 + $0x38] sm:$0xff] %v189
                %v191 = vld [vmem:[%s173 + $0x80] sm:$0xff]
                %192 = vst [vmem:[%s174 + $0x40] sm:$0xff] %v191
                %v193 = vld [vmem:[%s173 + $0x88] sm:$0xff]
                %194 = vst [vmem:[%s174 + $0x48] sm:$0xff] %v193
                %v195 = vld [vmem:[%s173 + $0x90] sm:$0xff]
                %196 = vst [vmem:[%s174 + $0x50] sm:$0xff] %v195
                %v197 = vld [vmem:[%s173 + $0x98] sm:$0xff]
                %198 = vst [vmem:[%s174 + $0x58] sm:$0xff] %v197
                %v199 = vld [vmem:[%s173 + $0xc0] sm:$0xff]
                %200 = vst [vmem:[%s174 + $0x60] sm:$0xff] %v199
                %v201 = vld [vmem:[%s173 + $0xc8] sm:$0xff]
                %202 = vst [vmem:[%s174 + $0x68] sm:$0xff] %v201
                %v203 = vld [vmem:[%s173 + $0xd0] sm:$0xff]
                %204 = vst [vmem:[%s174 + $0x70] sm:$0xff] %v203
                %v205 = vld [vmem:[%s173 + $0xd8] sm:$0xff]
                %206 = vst [vmem:[%s174 + $0x78] sm:$0xff] %v205
                %v207 = vld [vmem:[%s173 + $0x100] sm:$0xff]
                %208 = vst [vmem:[%s174 + $0x80] sm:$0xff] %v207
                %v209 = vld [vmem:[%s173 + $0x108] sm:$0xff]
                %210 = vst [vmem:[%s174 + $0x88] sm:$0xff] %v209
                %v211 = vld [vmem:[%s173 + $0x110] sm:$0xff]
                %212 = vst [vmem:[%s174 + $0x90] sm:$0xff] %v211
                %v213 = vld [vmem:[%s173 + $0x118] sm:$0xff]
                %214 = vst [vmem:[%s174 + $0x98] sm:$0xff] %v213
                %v215 = vld [vmem:[%s173 + $0x140] sm:$0xff]
                %216 = vst [vmem:[%s174 + $0xa0] sm:$0xff] %v215
                %v217 = vld [vmem:[%s173 + $0x148] sm:$0xff]
                %218 = vst [vmem:[%s174 + $0xa8] sm:$0xff] %v217
                %v219 = vld [vmem:[%s173 + $0x150] sm:$0xff]
                %220 = vst [vmem:[%s174 + $0xb0] sm:$0xff] %v219
                %v221 = vld [vmem:[%s173 + $0x158] sm:$0xff]
                %222 = vst [vmem:[%s174 + $0xb8] sm:$0xff] %v221
                %v223 = vld [vmem:[%s173 + $0x180] sm:$0xff]
                %224 = vst [vmem:[%s174 + $0xc0] sm:$0xff] %v223
                %v225 = vld [vmem:[%s173 + $0x188] sm:$0xff]
                %226 = vst [vmem:[%s174 + $0xc8] sm:$0xff] %v225
                %v227 = vld [vmem:[%s173 + $0x190] sm:$0xff]
                %228 = vst [vmem:[%s174 + $0xd0] sm:$0xff] %v227
                %v229 = vld [vmem:[%s173 + $0x198] sm:$0xff]
                %230 = vst [vmem:[%s174 + $0xd8] sm:$0xff] %v229
                %v231 = vld [vmem:[%s173 + $0x1c0] sm:$0xff]
                %232 = vst [vmem:[%s174 + $0xe0] sm:$0xff] %v231
                %v233 = vld [vmem:[%s173 + $0x1c8] sm:$0xff]
                %234 = vst [vmem:[%s174 + $0xe8] sm:$0xff] %v233
                %v235 = vld [vmem:[%s173 + $0x1d0] sm:$0xff]
                %236 = vst [vmem:[%s174 + $0xf0] sm:$0xff] %v235
                %v237 = vld [vmem:[%s173 + $0x1d8] sm:$0xff]
                %238 = vst [vmem:[%s174 + $0xf8] sm:$0xff] %v237
                %v239 = vld [vmem:[%s173 + $0x200] sm:$0xff]
                %240 = vst [vmem:[%s174 + $0x100] sm:$0xff] %v239
                %v241 = vld [vmem:[%s173 + $0x208] sm:$0xff]
                %242 = vst [vmem:[%s174 + $0x108] sm:$0xff] %v241
                %v243 = vld [vmem:[%s173 + $0x210] sm:$0xff]
                %244 = vst [vmem:[%s174 + $0x110] sm:$0xff] %v243
                %v245 = vld [vmem:[%s173 + $0x218] sm:$0xff]
                %246 = vst [vmem:[%s174 + $0x118] sm:$0xff] %v245
                %v247 = vld [vmem:[%s173 + $0x240] sm:$0xff]
                %248 = vst [vmem:[%s174 + $0x120] sm:$0xff] %v247
                %v249 = vld [vmem:[%s173 + $0x248] sm:$0xff]
                %250 = vst [vmem:[%s174 + $0x128] sm:$0xff] %v249
                %v251 = vld [vmem:[%s173 + $0x250] sm:$0xff]
                %252 = vst [vmem:[%s174 + $0x130] sm:$0xff] %v251
                %v253 = vld [vmem:[%s173 + $0x258] sm:$0xff]
                %254 = vst [vmem:[%s174 + $0x138] sm:$0xff] %v253
                %v255 = vld [vmem:[%s173 + $0x280] sm:$0xff]
                %256 = vst [vmem:[%s174 + $0x140] sm:$0xff] %v255
                %v257 = vld [vmem:[%s173 + $0x288] sm:$0xff]
                %258 = vst [vmem:[%s174 + $0x148] sm:$0xff] %v257
                %v259 = vld [vmem:[%s173 + $0x290] sm:$0xff]
                %260 = vst [vmem:[%s174 + $0x150] sm:$0xff] %v259
                %v261 = vld [vmem:[%s173 + $0x298] sm:$0xff]
                %262 = vst [vmem:[%s174 + $0x158] sm:$0xff] %v261
                %v263 = vld [vmem:[%s173 + $0x2c0] sm:$0xff]
                %264 = vst [vmem:[%s174 + $0x160] sm:$0xff] %v263
                %v265 = vld [vmem:[%s173 + $0x2c8] sm:$0xff]
                %266 = vst [vmem:[%s174 + $0x168] sm:$0xff] %v265
                %v267 = vld [vmem:[%s173 + $0x2d0] sm:$0xff]
                %268 = vst [vmem:[%s174 + $0x170] sm:$0xff] %v267
                %v269 = vld [vmem:[%s173 + $0x2d8] sm:$0xff]
                %270 = vst [vmem:[%s174 + $0x178] sm:$0xff] %v269
                %v271 = vld [vmem:[%s173 + $0x300] sm:$0xff]
                %272 = vst [vmem:[%s174 + $0x180] sm:$0xff] %v271
                %v273 = vld [vmem:[%s173 + $0x308] sm:$0xff]
                %274 = vst [vmem:[%s174 + $0x188] sm:$0xff] %v273
                %v275 = vld [vmem:[%s173 + $0x310] sm:$0xff]
                %276 = vst [vmem:[%s174 + $0x190] sm:$0xff] %v275
                %v277 = vld [vmem:[%s173 + $0x318] sm:$0xff]
                %278 = vst [vmem:[%s174 + $0x198] sm:$0xff] %v277
                %v279 = vld [vmem:[%s173 + $0x340] sm:$0xff]
                %280 = vst [vmem:[%s174 + $0x1a0] sm:$0xff] %v279
                %v281 = vld [vmem:[%s173 + $0x348] sm:$0xff]
                %282 = vst [vmem:[%s174 + $0x1a8] sm:$0xff] %v281
                %v283 = vld [vmem:[%s173 + $0x350] sm:$0xff]
                %284 = vst [vmem:[%s174 + $0x1b0] sm:$0xff] %v283
                %v285 = vld [vmem:[%s173 + $0x358] sm:$0xff]
                %286 = vst [vmem:[%s174 + $0x1b8] sm:$0xff] %v285
                %v287 = vld [vmem:[%s173 + $0x380] sm:$0xff]
                %288 = vst [vmem:[%s174 + $0x1c0] sm:$0xff] %v287
                %v289 = vld [vmem:[%s173 + $0x388] sm:$0xff]
                %290 = vst [vmem:[%s174 + $0x1c8] sm:$0xff] %v289
                %v291 = vld [vmem:[%s173 + $0x390] sm:$0xff]
                %292 = vst [vmem:[%s174 + $0x1d0] sm:$0xff] %v291
                %v293 = vld [vmem:[%s173 + $0x398] sm:$0xff]
                %294 = vst [vmem:[%s174 + $0x1d8] sm:$0xff] %v293
                %v295 = vld [vmem:[%s173 + $0x3c0] sm:$0xff]
                %296 = vst [vmem:[%s174 + $0x1e0] sm:$0xff] %v295
                %v297 = vld [vmem:[%s173 + $0x3c8] sm:$0xff]
                %298 = vst [vmem:[%s174 + $0x1e8] sm:$0xff] %v297
                %v299 = vld [vmem:[%s173 + $0x3d0] sm:$0xff]
                %300 = vst [vmem:[%s174 + $0x1f0] sm:$0xff] %v299
                %v301 = vld [vmem:[%s173 + $0x3d8] sm:$0xff]
                %302 = vst [vmem:[%s174 + $0x1f8] sm:$0xff] %v301
              $region45: #{gt_pooling_forward.1} parent=39 // loop_footer
                %s172 = sadd.s32 1, %s168
              $region46: #{gt_pooling_forward.1} parent=39 // loop_footer_branch
                %167 = sbr.rel target = $region42
              $region47: #{gt_pooling_forward.1} parent=39 // loop_exit
                _
            $region40: #{gt_pooling_forward.1} parent=35 // pred_fallthru
              _
            // Predicated region
            $region48: #{gt_pooling_forward.1} parent=35 // pred_check
              _
            $region49: #{gt_pooling_forward.1} parent=35 // pred_check_branch
              %304 = sbr.rel target = $region51
            $region50: #{gt_pooling_forward.1} parent=35 // pred_region
              _
            $region51: #{gt_pooling_forward.1} parent=35 // pred_fallthru
              _
          $region36: #{gt_pooling_forward.1} parent=31 // pred_fallthru
            _
          %305 = vnop
        $region32: #{gt_pooling_forward.1} parent=27 // pred_fallthru
          _
      $region28: #{gt_pooling_forward.1} parent=5 // pred_fallthru
        _
      %p306 = scmp.le.s32.totalorder 1, %s10
      %p307 = scmp.lt.s32.totalorder %s10, 3
      %p308 = pnand %p306, %p307
      %p309 = pneg %p308
      // Predicated region
      $region52: #{gt_pooling_forward.1} parent=5 // pred_check
        _
      $region53: #{gt_pooling_forward.1} parent=5 // pred_check_branch
        %311 = sbr.rel (%p308) target = $region55
      $region54: #{gt_pooling_forward.1} parent=5 // pred_region
        %s312 = ssub.s32 %s10, 1
        %s313 = sand.u32 %s23, 1
        %s314 = sand.u32 %s23, 1
        %s315 = smul.addr %s314, 512
        %s316 = scalar_lea.vmem [#allocation2], %s315
        // Predicated region
        $region56: #{gt_pooling_forward.1} parent=54 // pred_check
          %p317 = pneg %p36
        $region57: #{gt_pooling_forward.1} parent=54 // pred_check_branch
          %319 = sbr.rel (%p317) target = $region59
        $region58: #{gt_pooling_forward.1} parent=54 // pred_region
          _
        $region59: #{gt_pooling_forward.1} parent=54 // pred_fallthru
          _
        %s320 = sand.u32 %s23, 1
        %s321 = sand.u32 %s23, 1
        %s322 = smul.addr %s321, 512
        %s323 = scalar_lea.vmem [#allocation2], %s322
        %p324 = pneg %p36
        %p325 = pneg %p33
        %p326 = pneg %p57
        %p327 = pneg %p54
        %p328 = pneg %p78
        %p329 = pneg %p75
        %p330 = pneg %p99
        %p331 = pneg %p96
        %p332 = pneg %p125
        %p333 = pneg %p122
        %s334 = sand.u32 %s112, 1
        %s335 = sand.u32 %s112, 1
        %s336 = smul.addr %s335, 64
        %s337 = scalar_lea.vmem [#allocation3], %s336
        %s338 = smul.u32 4, %s15
        %s339 = smul.u32 4, %s15
        %v340 = vld [vmem:[%s1] sm:$0xff]
        %v341 = vld [vmem:[%s1 + $0x8] sm:$0xff]
        %v342 = vld [vmem:[%s1 + $0x10] sm:$0xff]
        %v343 = vld [vmem:[%s1 + $0x18] sm:$0xff]
        %v344 = vld [vmem:[%s1 + $0x20] sm:$0xff]
        %v345 = vld [vmem:[%s1 + $0x28] sm:$0xff]
        %v346 = vld [vmem:[%s1 + $0x30] sm:$0xff]
        %v347 = vld [vmem:[%s1 + $0x38] sm:$0xff]
        %v348 = vld [vmem:[%s1 + $0x40] sm:$0xff]
        %v349 = vld [vmem:[%s1 + $0x48] sm:$0xff]
        %v350 = vld [vmem:[%s1 + $0x50] sm:$0xff]
        %v351 = vld [vmem:[%s1 + $0x58] sm:$0xff]
        %v352 = vld [vmem:[%s1 + $0x60] sm:$0xff]
        %v353 = vld [vmem:[%s1 + $0x68] sm:$0xff]
        %v354 = vld [vmem:[%s1 + $0x70] sm:$0xff]
        %v355 = vld [vmem:[%s1 + $0x78] sm:$0xff]
        %v356 = vld [vmem:[%s316] sm:$0xff]
        %v357 = vld [vmem:[%s316 + $0x8] sm:$0xff]
        %v358 = vld [vmem:[%s316 + $0x10] sm:$0xff]
        %v359 = vld [vmem:[%s316 + $0x18] sm:$0xff]
        %v360 = vld [vmem:[%s316 + $0x20] sm:$0xff]
        %v361 = vld [vmem:[%s316 + $0x28] sm:$0xff]
        %v362 = vld [vmem:[%s316 + $0x30] sm:$0xff]
        %v363 = vld [vmem:[%s316 + $0x38] sm:$0xff]
        %v364 = vld [vmem:[%s316 + $0x40] sm:$0xff]
        %v365 = vld [vmem:[%s316 + $0x48] sm:$0xff]
        %v366 = vld [vmem:[%s316 + $0x50] sm:$0xff]
        %v367 = vld [vmem:[%s316 + $0x58] sm:$0xff]
        %v368 = vld [vmem:[%s316 + $0x60] sm:$0xff]
        %v369 = vld [vmem:[%s316 + $0x68] sm:$0xff]
        %v370 = vld [vmem:[%s316 + $0x70] sm:$0xff]
        %v371 = vld [vmem:[%s316 + $0x78] sm:$0xff]
        %v372 = vld [vmem:[%s316 + $0x80] sm:$0xff]
        %v373 = vld [vmem:[%s316 + $0x88] sm:$0xff]
        %v374 = vld [vmem:[%s316 + $0x90] sm:$0xff]
        %v375 = vld [vmem:[%s316 + $0x98] sm:$0xff]
        %v376 = vld [vmem:[%s316 + $0xa0] sm:$0xff]
        %v377 = vld [vmem:[%s316 + $0xa8] sm:$0xff]
        %v378 = vld [vmem:[%s316 + $0xb0] sm:$0xff]
        %v379 = vld [vmem:[%s316 + $0xb8] sm:$0xff]
        %v380 = vld [vmem:[%s316 + $0xc0] sm:$0xff]
        %v381 = vld [vmem:[%s316 + $0xc8] sm:$0xff]
        %v382 = vld [vmem:[%s316 + $0xd0] sm:$0xff]
        %v383 = vld [vmem:[%s316 + $0xd8] sm:$0xff]
        %v384 = vld [vmem:[%s316 + $0xe0] sm:$0xff]
        %v385 = vld [vmem:[%s316 + $0xe8] sm:$0xff]
        %v386 = vld [vmem:[%s316 + $0xf0] sm:$0xff]
        %v387 = vld [vmem:[%s316 + $0xf8] sm:$0xff]
        %v388 = vld [vmem:[%s316 + $0x100] sm:$0xff]
        %v389 = vld [vmem:[%s316 + $0x108] sm:$0xff]
        %v390 = vld [vmem:[%s316 + $0x110] sm:$0xff]
        %v391 = vld [vmem:[%s316 + $0x118] sm:$0xff]
        %v392 = vld [vmem:[%s316 + $0x120] sm:$0xff]
        %v393 = vld [vmem:[%s316 + $0x128] sm:$0xff]
        %v394 = vld [vmem:[%s316 + $0x130] sm:$0xff]
        %v395 = vld [vmem:[%s316 + $0x138] sm:$0xff]
        %v396 = vld [vmem:[%s316 + $0x140] sm:$0xff]
        %v397 = vld [vmem:[%s316 + $0x148] sm:$0xff]
        %v398 = vld [vmem:[%s316 + $0x150] sm:$0xff]
        %v399 = vld [vmem:[%s316 + $0x158] sm:$0xff]
        %v400 = vld [vmem:[%s316 + $0x160] sm:$0xff]
        %v401 = vld [vmem:[%s316 + $0x168] sm:$0xff]
        %v402 = vld [vmem:[%s316 + $0x170] sm:$0xff]
        %v403 = vld [vmem:[%s316 + $0x178] sm:$0xff]
        %v404 = vld [vmem:[%s316 + $0x180] sm:$0xff]
        %v405 = vld [vmem:[%s316 + $0x188] sm:$0xff]
        %v406 = vld [vmem:[%s316 + $0x190] sm:$0xff]
        %v407 = vld [vmem:[%s316 + $0x198] sm:$0xff]
        %v408 = vld [vmem:[%s316 + $0x1a0] sm:$0xff]
        %v409 = vld [vmem:[%s316 + $0x1a8] sm:$0xff]
        %v410 = vld [vmem:[%s316 + $0x1b0] sm:$0xff]
        %v411 = vld [vmem:[%s316 + $0x1b8] sm:$0xff]
        %v412 = vld [vmem:[%s316 + $0x1c0] sm:$0xff]
        %v413 = vld [vmem:[%s316 + $0x1c8] sm:$0xff]
        %v414 = vld [vmem:[%s316 + $0x1d0] sm:$0xff]
        %v415 = vld [vmem:[%s316 + $0x1d8] sm:$0xff]
        %v416 = vld [vmem:[%s316 + $0x1e0] sm:$0xff]
        %v417 = vld [vmem:[%s316 + $0x1e8] sm:$0xff]
        %v418 = vld [vmem:[%s316 + $0x1f0] sm:$0xff]
        %v419 = vld [vmem:[%s316 + $0x1f8] sm:$0xff]
        %420 = vmatprep.subr.mxu0 %v357
        %421 = vmatpush1.msra.mxu0 %v356
        %422 = vmatprep.subr.mxu0 %v361
        %423 = vmatpush1.msra.mxu0 %v360
        %424 = vmatprep.subr.mxu0 %v365
        %425 = vmatpush1.msra.mxu0 %v364
        %426 = vmatprep.subr.mxu0 %v369
        %427 = vmatpush1.msra.mxu0 %v368
        %428 = vmatprep.subr.mxu0 %v373
        %429 = vmatpush1.msra.mxu0 %v372
        %430 = vmatprep.subr.mxu0 %v377
        %431 = vmatpush1.msra.mxu0 %v376
        %432 = vmatprep.subr.mxu0 %v381
        %433 = vmatpush1.msra.mxu0 %v380
        %434 = vmatprep.subr.mxu0 %v385
        %435 = vmatpush1.msra.mxu0 %v384
        %436 = vmatprep.subr.mxu0 %v389
        %437 = vmatpush1.msra.mxu0 %v388
        %438 = vmatprep.subr.mxu0 %v393
        %439 = vmatpush1.msra.mxu0 %v392
        %440 = vmatprep.subr.mxu0 %v397
        %441 = vmatpush1.msra.mxu0 %v396
        %442 = vmatprep.subr.mxu0 %v401
        %443 = vmatpush1.msra.mxu0 %v400
        %444 = vmatprep.subr.mxu0 %v405
        %445 = vmatpush1.msra.mxu0 %v404
        %446 = vmatprep.subr.mxu0 %v409
        %447 = vmatpush1.msra.mxu0 %v408
        %448 = vmatprep.subr.mxu0 %v413
        %449 = vmatpush1.msra.mxu0 %v412
        %450 = vmatprep.subr.mxu0 %v417
        %451 = vmatpush1.msra.mxu0 %v416
        %452 = vmatprep.subr.mxu0 0.0
        %453 = vmatpush1.msra.mxu0 0.0
        %454 = vmatprep.subr.mxu0 0.0
        %455 = vmatpush1.msra.mxu0 0.0
        %456 = vmatprep.subr.mxu0 0.0
        %457 = vmatpush1.msra.mxu0 0.0
        %458 = vmatprep.subr.mxu0 0.0
        %459 = vmatpush1.msra.mxu0 0.0
        %460 = vmatprep.subr.mxu0 0.0
        %461 = vmatpush1.msra.mxu0 0.0
        %462 = vmatprep.subr.mxu0 0.0
        %463 = vmatpush1.msra.mxu0 0.0
        %464 = vmatprep.subr.mxu0 0.0
        %465 = vmatpush1.msra.mxu0 0.0
        %466 = vmatprep.subr.mxu0 0.0
        %467 = vmatpush1.msra.mxu0 0.0
        %468 = vmatprep.subr.mxu0 0.0
        %469 = vmatpush1.msra.mxu0 0.0
        %470 = vmatprep.subr.mxu0 0.0
        %471 = vmatpush1.msra.mxu0 0.0
        %472 = vmatprep.subr.mxu0 0.0
        %473 = vmatpush1.msra.mxu0 0.0
        %474 = vmatprep.subr.mxu0 0.0
        %475 = vmatpush1.msra.mxu0 0.0
        %476 = vmatprep.subr.mxu0 0.0
        %477 = vmatpush1.msra.mxu0 0.0
        %478 = vmatprep.subr.mxu0 0.0
        %479 = vmatpush1.msra.mxu0 0.0
        %480 = vmatprep.subr.mxu0 0.0
        %481 = vmatpush1.msra.mxu0 0.0
        %482 = vmatprep.subr.mxu0 0.0
        %483 = vmatpush1.msra.mxu0 0.0
        %484 = vmatprep.mubr.f32.mxu0 0.0
        %485 = vmatmul.mubr.f32.gmra.mrb[0].mxu0 %v340
        %v486 = vpop.f32.mrb[0].mxu0
        %v487 = vadd.f32 0.0, %v486
        %v488 = vpop.f32.mrb[0].mxu0
        %v489 = vadd.f32 0.0, %v488
        %490 = vmatprep.mubr.f32.mxu0 0.0
        %491 = vmatmul.mubr.f32.gmra.mrb[0].mxu0 %v341
        %v492 = vpop.f32.mrb[0].mxu0
        %v493 = vadd.f32 0.0, %v492
        %v494 = vpop.f32.mrb[0].mxu0
        %v495 = vadd.f32 0.0, %v494
        %496 = vmatprep.mubr.f32.mxu0 0.0
        %497 = vmatmul.mubr.f32.gmra.mrb[0].mxu0 %v342
        %v498 = vpop.f32.mrb[0].mxu0
        %v499 = vadd.f32 0.0, %v498
        %v500 = vpop.f32.mrb[0].mxu0
        %v501 = vadd.f32 0.0, %v500
        %502 = vmatprep.mubr.f32.mxu0 0.0
        %503 = vmatmul.mubr.f32.gmra.mrb[0].mxu0 %v343
        %v504 = vpop.f32.mrb[0].mxu0
        %v505 = vadd.f32 0.0, %v504
        %v506 = vpop.f32.mrb[0].mxu0
        %v507 = vadd.f32 0.0, %v506
        %508 = vmatprep.mubr.f32.mxu0 0.0
        %509 = vmatmul.mubr.f32.gmra.mrb[0].mxu0 %v344
        %v510 = vpop.f32.mrb[0].mxu0
        %v511 = vadd.f32 0.0, %v510
        %v512 = vpop.f32.mrb[0].mxu0
        %v513 = vadd.f32 0.0, %v512
        %514 = vmatprep.mubr.f32.mxu0 0.0
        %515 = vmatmul.mubr.f32.gmra.mrb[0].mxu0 %v345
        %v516 = vpop.f32.mrb[0].mxu0
        %v517 = vadd.f32 0.0, %v516
        %v518 = vpop.f32.mrb[0].mxu0
        %v519 = vadd.f32 0.0, %v518
        %520 = vmatprep.mubr.f32.mxu0 0.0
        %521 = vmatmul.mubr.f32.gmra.mrb[0].mxu0 %v346
        %v522 = vpop.f32.mrb[0].mxu0
        %v523 = vadd.f32 0.0, %v522
        %v524 = vpop.f32.mrb[0].mxu0
        %v525 = vadd.f32 0.0, %v524
        %526 = vmatprep.mubr.f32.mxu0 0.0
        %527 = vmatmul.mubr.f32.gmra.mrb[0].mxu0 %v347
        %v528 = vpop.f32.mrb[0].mxu0
        %v529 = vadd.f32 0.0, %v528
        %v530 = vpop.f32.mrb[0].mxu0
        %v531 = vadd.f32 0.0, %v530
        %532 = vmatprep.mubr.f32.mxu0 0.0
        %533 = vmatmul.mubr.f32.gmra.mrb[0].mxu0 %v348
        %v534 = vpop.f32.mrb[0].mxu0
        %v535 = vadd.f32 0.0, %v534
        %v536 = vpop.f32.mrb[0].mxu0
        %v537 = vadd.f32 0.0, %v536
        %538 = vmatprep.mubr.f32.mxu0 0.0
        %539 = vmatmul.mubr.f32.gmra.mrb[0].mxu0 %v349
        %v540 = vpop.f32.mrb[0].mxu0
        %v541 = vadd.f32 0.0, %v540
        %v542 = vpop.f32.mrb[0].mxu0
        %v543 = vadd.f32 0.0, %v542
        %544 = vmatprep.mubr.f32.mxu0 0.0
        %545 = vmatmul.mubr.f32.gmra.mrb[0].mxu0 %v350
        %v546 = vpop.f32.mrb[0].mxu0
        %v547 = vadd.f32 0.0, %v546
        %v548 = vpop.f32.mrb[0].mxu0
        %v549 = vadd.f32 0.0, %v548
        %550 = vmatprep.mubr.f32.mxu0 0.0
        %551 = vmatmul.mubr.f32.gmra.mrb[0].mxu0 %v351
        %v552 = vpop.f32.mrb[0].mxu0
        %v553 = vadd.f32 0.0, %v552
        %v554 = vpop.f32.mrb[0].mxu0
        %v555 = vadd.f32 0.0, %v554
        %556 = vmatprep.mubr.f32.mxu0 0.0
        %557 = vmatmul.mubr.f32.gmra.mrb[0].mxu0 %v352
        %v558 = vpop.f32.mrb[0].mxu0
        %v559 = vadd.f32 0.0, %v558
        %v560 = vpop.f32.mrb[0].mxu0
        %v561 = vadd.f32 0.0, %v560
        %562 = vmatprep.mubr.f32.mxu0 0.0
        %563 = vmatmul.mubr.f32.gmra.mrb[0].mxu0 %v353
        %v564 = vpop.f32.mrb[0].mxu0
        %v565 = vadd.f32 0.0, %v564
        %v566 = vpop.f32.mrb[0].mxu0
        %v567 = vadd.f32 0.0, %v566
        %568 = vmatprep.mubr.f32.mxu0 0.0
        %569 = vmatmul.mubr.f32.gmra.mrb[0].mxu0 %v354
        %v570 = vpop.f32.mrb[0].mxu0
        %v571 = vadd.f32 0.0, %v570
        %v572 = vpop.f32.mrb[0].mxu0
        %v573 = vadd.f32 0.0, %v572
        %574 = vmatprep.mubr.f32.mxu0 0.0
        %575 = vmatmul.mubr.f32.gmra.mrb[0].mxu0 %v355
        %v576 = vpop.f32.mrb[0].mxu0
        %v577 = vadd.f32 0.0, %v576
        %v578 = vpop.f32.mrb[0].mxu0
        %v579 = vadd.f32 0.0, %v578
        %580 = vdwg.mxu0
        %581 = vmatprep.subr.mxu0 %v359
        %582 = vmatpush1.msra.mxu0 %v358
        %583 = vmatprep.subr.mxu0 %v363
        %584 = vmatpush1.msra.mxu0 %v362
        %585 = vmatprep.subr.mxu0 %v367
        %586 = vmatpush1.msra.mxu0 %v366
        %587 = vmatprep.subr.mxu0 %v371
        %588 = vmatpush1.msra.mxu0 %v370
        %589 = vmatprep.subr.mxu0 %v375
        %590 = vmatpush1.msra.mxu0 %v374
        %591 = vmatprep.subr.mxu0 %v379
        %592 = vmatpush1.msra.mxu0 %v378
        %593 = vmatprep.subr.mxu0 %v383
        %594 = vmatpush1.msra.mxu0 %v382
        %595 = vmatprep.subr.mxu0 %v387
        %596 = vmatpush1.msra.mxu0 %v386
        %597 = vmatprep.subr.mxu0 %v391
        %598 = vmatpush1.msra.mxu0 %v390
        %599 = vmatprep.subr.mxu0 %v395
        %600 = vmatpush1.msra.mxu0 %v394
        %601 = vmatprep.subr.mxu0 %v399
        %602 = vmatpush1.msra.mxu0 %v398
        %603 = vmatprep.subr.mxu0 %v403
        %604 = vmatpush1.msra.mxu0 %v402
        %605 = vmatprep.subr.mxu0 %v407
        %606 = vmatpush1.msra.mxu0 %v406
        %607 = vmatprep.subr.mxu0 %v411
        %608 = vmatpush1.msra.mxu0 %v410
        %609 = vmatprep.subr.mxu0 %v415
        %610 = vmatpush1.msra.mxu0 %v414
        %611 = vmatprep.subr.mxu0 %v419
        %612 = vmatpush1.msra.mxu0 %v418
        %613 = vmatprep.subr.mxu0 0.0
        %614 = vmatpush1.msra.mxu0 0.0
        %615 = vmatprep.subr.mxu0 0.0
        %616 = vmatpush1.msra.mxu0 0.0
        %617 = vmatprep.subr.mxu0 0.0
        %618 = vmatpush1.msra.mxu0 0.0
        %619 = vmatprep.subr.mxu0 0.0
        %620 = vmatpush1.msra.mxu0 0.0
        %621 = vmatprep.subr.mxu0 0.0
        %622 = vmatpush1.msra.mxu0 0.0
        %623 = vmatprep.subr.mxu0 0.0
        %624 = vmatpush1.msra.mxu0 0.0
        %625 = vmatprep.subr.mxu0 0.0
        %626 = vmatpush1.msra.mxu0 0.0
        %627 = vmatprep.subr.mxu0 0.0
        %628 = vmatpush1.msra.mxu0 0.0
        %629 = vmatprep.subr.mxu0 0.0
        %630 = vmatpush1.msra.mxu0 0.0
        %631 = vmatprep.subr.mxu0 0.0
        %632 = vmatpush1.msra.mxu0 0.0
        %633 = vmatprep.subr.mxu0 0.0
        %634 = vmatpush1.msra.mxu0 0.0
        %635 = vmatprep.subr.mxu0 0.0
        %636 = vmatpush1.msra.mxu0 0.0
        %637 = vmatprep.subr.mxu0 0.0
        %638 = vmatpush1.msra.mxu0 0.0
        %639 = vmatprep.subr.mxu0 0.0
        %640 = vmatpush1.msra.mxu0 0.0
        %641 = vmatprep.subr.mxu0 0.0
        %642 = vmatpush1.msra.mxu0 0.0
        %643 = vmatprep.subr.mxu0 0.0
        %644 = vmatpush1.msra.mxu0 0.0
        %645 = vmatprep.mubr.f32.mxu0 0.0
        %646 = vmatmul.mubr.f32.gmra.mrb[0].mxu0 %v340
        %v647 = vpop.f32.mrb[0].mxu0
        %v648 = vadd.f32 0.0, %v647
        %v649 = vpop.f32.mrb[0].mxu0
        %v650 = vadd.f32 0.0, %v649
        %651 = vmatprep.mubr.f32.mxu0 0.0
        %652 = vmatmul.mubr.f32.gmra.mrb[0].mxu0 %v341
        %v653 = vpop.f32.mrb[0].mxu0
        %v654 = vadd.f32 0.0, %v653
        %v655 = vpop.f32.mrb[0].mxu0
        %v656 = vadd.f32 0.0, %v655
        %657 = vmatprep.mubr.f32.mxu0 0.0
        %658 = vmatmul.mubr.f32.gmra.mrb[0].mxu0 %v342
        %v659 = vpop.f32.mrb[0].mxu0
        %v660 = vadd.f32 0.0, %v659
        %v661 = vpop.f32.mrb[0].mxu0
        %v662 = vadd.f32 0.0, %v661
        %663 = vmatprep.mubr.f32.mxu0 0.0
        %664 = vmatmul.mubr.f32.gmra.mrb[0].mxu0 %v343
        %v665 = vpop.f32.mrb[0].mxu0
        %v666 = vadd.f32 0.0, %v665
        %v667 = vpop.f32.mrb[0].mxu0
        %v668 = vadd.f32 0.0, %v667
        %669 = vmatprep.mubr.f32.mxu0 0.0
        %670 = vmatmul.mubr.f32.gmra.mrb[0].mxu0 %v344
        %v671 = vpop.f32.mrb[0].mxu0
        %v672 = vadd.f32 0.0, %v671
        %v673 = vpop.f32.mrb[0].mxu0
        %v674 = vadd.f32 0.0, %v673
        %675 = vmatprep.mubr.f32.mxu0 0.0
        %676 = vmatmul.mubr.f32.gmra.mrb[0].mxu0 %v345
        %v677 = vpop.f32.mrb[0].mxu0
        %v678 = vadd.f32 0.0, %v677
        %v679 = vpop.f32.mrb[0].mxu0
        %v680 = vadd.f32 0.0, %v679
        %681 = vmatprep.mubr.f32.mxu0 0.0
        %682 = vmatmul.mubr.f32.gmra.mrb[0].mxu0 %v346
        %v683 = vpop.f32.mrb[0].mxu0
        %v684 = vadd.f32 0.0, %v683
        %v685 = vpop.f32.mrb[0].mxu0
        %v686 = vadd.f32 0.0, %v685
        %687 = vmatprep.mubr.f32.mxu0 0.0
        %688 = vmatmul.mubr.f32.gmra.mrb[0].mxu0 %v347
        %v689 = vpop.f32.mrb[0].mxu0
        %v690 = vadd.f32 0.0, %v689
        %v691 = vpop.f32.mrb[0].mxu0
        %v692 = vadd.f32 0.0, %v691
        %693 = vmatprep.mubr.f32.mxu0 0.0
        %694 = vmatmul.mubr.f32.gmra.mrb[0].mxu0 %v348
        %v695 = vpop.f32.mrb[0].mxu0
        %v696 = vadd.f32 0.0, %v695
        %v697 = vpop.f32.mrb[0].mxu0
        %v698 = vadd.f32 0.0, %v697
        %699 = vmatprep.mubr.f32.mxu0 0.0
        %700 = vmatmul.mubr.f32.gmra.mrb[0].mxu0 %v349
        %v701 = vpop.f32.mrb[0].mxu0
        %v702 = vadd.f32 0.0, %v701
        %v703 = vpop.f32.mrb[0].mxu0
        %v704 = vadd.f32 0.0, %v703
        %705 = vmatprep.mubr.f32.mxu0 0.0
        %706 = vmatmul.mubr.f32.gmra.mrb[0].mxu0 %v350
        %v707 = vpop.f32.mrb[0].mxu0
        %v708 = vadd.f32 0.0, %v707
        %v709 = vpop.f32.mrb[0].mxu0
        %v710 = vadd.f32 0.0, %v709
        %711 = vmatprep.mubr.f32.mxu0 0.0
        %712 = vmatmul.mubr.f32.gmra.mrb[0].mxu0 %v351
        %v713 = vpop.f32.mrb[0].mxu0
        %v714 = vadd.f32 0.0, %v713
        %v715 = vpop.f32.mrb[0].mxu0
        %v716 = vadd.f32 0.0, %v715
        %717 = vmatprep.mubr.f32.mxu0 0.0
        %718 = vmatmul.mubr.f32.gmra.mrb[0].mxu0 %v352
        %v719 = vpop.f32.mrb[0].mxu0
        %v720 = vadd.f32 0.0, %v719
        %v721 = vpop.f32.mrb[0].mxu0
        %v722 = vadd.f32 0.0, %v721
        %723 = vmatprep.mubr.f32.mxu0 0.0
        %724 = vmatmul.mubr.f32.gmra.mrb[0].mxu0 %v353
        %v725 = vpop.f32.mrb[0].mxu0
        %v726 = vadd.f32 0.0, %v725
        %v727 = vpop.f32.mrb[0].mxu0
        %v728 = vadd.f32 0.0, %v727
        %729 = vmatprep.mubr.f32.mxu0 0.0
        %730 = vmatmul.mubr.f32.gmra.mrb[0].mxu0 %v354
        %v731 = vpop.f32.mrb[0].mxu0
        %v732 = vadd.f32 0.0, %v731
        %v733 = vpop.f32.mrb[0].mxu0
        %v734 = vadd.f32 0.0, %v733
        %735 = vmatprep.mubr.f32.mxu0 0.0
        %736 = vmatmul.mubr.f32.gmra.mrb[0].mxu0 %v355
        %v737 = vpop.f32.mrb[0].mxu0
        %v738 = vadd.f32 0.0, %v737
        %v739 = vpop.f32.mrb[0].mxu0
        %v740 = vadd.f32 0.0, %v739
        %741 = vdwg.mxu0
        %v742 = vmax.f32 %v487, %v493
        %v743 = vmax.f32 %v489, %v495
        %v744 = vmax.f32 %v648, %v654
        %v745 = vmax.f32 %v650, %v656
        %v746 = vmax.f32 %v742, %v499
        %v747 = vmax.f32 %v743, %v501
        %v748 = vmax.f32 %v744, %v660
        %v749 = vmax.f32 %v745, %v662
        %v750 = vmax.f32 %v746, %v505
        %v751 = vmax.f32 %v747, %v507
        %v752 = vmax.f32 %v748, %v666
        %v753 = vmax.f32 %v749, %v668
        %v754 = vmax.f32 %v750, %v511
        %v755 = vmax.f32 %v751, %v513
        %v756 = vmax.f32 %v752, %v672
        %v757 = vmax.f32 %v753, %v674
        %v758 = vmax.f32 %v754, %v517
        %v759 = vmax.f32 %v755, %v519
        %v760 = vmax.f32 %v756, %v678
        %v761 = vmax.f32 %v757, %v680
        %v762 = vmax.f32 %v758, %v523
        %v763 = vmax.f32 %v759, %v525
        %v764 = vmax.f32 %v760, %v684
        %v765 = vmax.f32 %v761, %v686
        %v766 = vmax.f32 %v762, %v529
        %v767 = vmax.f32 %v763, %v531
        %v768 = vmax.f32 %v764, %v690
        %v769 = vmax.f32 %v765, %v692
        %v770 = vmax.f32 %v766, %v535
        %v771 = vmax.f32 %v767, %v537
        %v772 = vmax.f32 %v768, %v696
        %v773 = vmax.f32 %v769, %v698
        %v774 = vmax.f32 %v770, %v541
        %v775 = vmax.f32 %v771, %v543
        %v776 = vmax.f32 %v772, %v702
        %v777 = vmax.f32 %v773, %v704
        %v778 = vmax.f32 %v774, %v547
        %v779 = vmax.f32 %v775, %v549
        %v780 = vmax.f32 %v776, %v708
        %v781 = vmax.f32 %v777, %v710
        %v782 = vmax.f32 %v778, %v553
        %v783 = vmax.f32 %v779, %v555
        %v784 = vmax.f32 %v780, %v714
        %v785 = vmax.f32 %v781, %v716
        %v786 = vmax.f32 %v782, %v559
        %v787 = vmax.f32 %v783, %v561
        %v788 = vmax.f32 %v784, %v720
        %v789 = vmax.f32 %v785, %v722
        %v790 = vmax.f32 %v786, %v565
        %v791 = vmax.f32 %v787, %v567
        %v792 = vmax.f32 %v788, %v726
        %v793 = vmax.f32 %v789, %v728
        %v794 = vmax.f32 %v790, %v571
        %v795 = vmax.f32 %v791, %v573
        %v796 = vmax.f32 %v792, %v732
        %v797 = vmax.f32 %v793, %v734
        %v798 = vmax.f32 %v794, %v577
        %v799 = vmax.f32 %v795, %v579
        %v800 = vmax.f32 %v796, %v738
        %v801 = vmax.f32 %v797, %v740
        %v802 = vsub.f32 %v487, %v798
        %v803 = vsub.f32 %v489, %v799
        %v804 = vsub.f32 %v648, %v800
        %v805 = vsub.f32 %v650, %v801
        %v806 = vmul.f32 %v802, 1.442695
        %v807 = vpow.pop %v806
        %v808 = vmul.f32 %v803, 1.442695
        %v809 = vpow.pop %v808
        %v810 = vmul.f32 %v804, 1.442695
        %v811 = vpow.pop %v810
        %v812 = vmul.f32 %v805, 1.442695
        %v813 = vpow.pop %v812
        %v814 = vadd.f32 %v807, 0.0
        %v815 = vadd.f32 %v809, 0.0
        %v816 = vadd.f32 %v811, 0.0
        %v817 = vadd.f32 %v813, 0.0
        %v818 = vld [vmem:[%s316] sm:$0xff]
        %v819 = vld [vmem:[%s316 + $0x8] sm:$0xff]
        %v820 = vld [vmem:[%s316 + $0x10] sm:$0xff]
        %v821 = vld [vmem:[%s316 + $0x18] sm:$0xff]
        %v822 = vmul.f32 %v818, %v807
        %v823 = vmul.f32 %v819, %v809
        %v824 = vmul.f32 %v820, %v811
        %v825 = vmul.f32 %v821, %v813
        %v826 = vadd.f32 %v822, 0.0
        %v827 = vadd.f32 %v823, 0.0
        %v828 = vadd.f32 %v824, 0.0
        %v829 = vadd.f32 %v825, 0.0
        %v830 = vsub.f32 %v493, %v798
        %v831 = vsub.f32 %v495, %v799
        %v832 = vsub.f32 %v654, %v800
        %v833 = vsub.f32 %v656, %v801
        %v834 = vmul.f32 %v830, 1.442695
        %v835 = vpow.pop %v834
        %v836 = vmul.f32 %v831, 1.442695
        %v837 = vpow.pop %v836
        %v838 = vmul.f32 %v832, 1.442695
        %v839 = vpow.pop %v838
        %v840 = vmul.f32 %v833, 1.442695
        %v841 = vpow.pop %v840
        %v842 = vadd.f32 %v814, %v835
        %v843 = vadd.f32 %v815, %v837
        %v844 = vadd.f32 %v816, %v839
        %v845 = vadd.f32 %v817, %v841
        %v846 = vld [vmem:[%s316 + $0x20] sm:$0xff]
        %v847 = vld [vmem:[%s316 + $0x28] sm:$0xff]
        %v848 = vld [vmem:[%s316 + $0x30] sm:$0xff]
        %v849 = vld [vmem:[%s316 + $0x38] sm:$0xff]
        %v850 = vmul.f32 %v846, %v835
        %v851 = vmul.f32 %v847, %v837
        %v852 = vmul.f32 %v848, %v839
        %v853 = vmul.f32 %v849, %v841
        %v854 = vadd.f32 %v826, %v850
        %v855 = vadd.f32 %v827, %v851
        %v856 = vadd.f32 %v828, %v852
        %v857 = vadd.f32 %v829, %v853
        %v858 = vsub.f32 %v499, %v798
        %v859 = vsub.f32 %v501, %v799
        %v860 = vsub.f32 %v660, %v800
        %v861 = vsub.f32 %v662, %v801
        %v862 = vmul.f32 %v858, 1.442695
        %v863 = vpow.pop %v862
        %v864 = vmul.f32 %v859, 1.442695
        %v865 = vpow.pop %v864
        %v866 = vmul.f32 %v860, 1.442695
        %v867 = vpow.pop %v866
        %v868 = vmul.f32 %v861, 1.442695
        %v869 = vpow.pop %v868
        %v870 = vadd.f32 %v842, %v863
        %v871 = vadd.f32 %v843, %v865
        %v872 = vadd.f32 %v844, %v867
        %v873 = vadd.f32 %v845, %v869
        %v874 = vld [vmem:[%s316 + $0x40] sm:$0xff]
        %v875 = vld [vmem:[%s316 + $0x48] sm:$0xff]
        %v876 = vld [vmem:[%s316 + $0x50] sm:$0xff]
        %v877 = vld [vmem:[%s316 + $0x58] sm:$0xff]
        %v878 = vmul.f32 %v874, %v863
        %v879 = vmul.f32 %v875, %v865
        %v880 = vmul.f32 %v876, %v867
        %v881 = vmul.f32 %v877, %v869
        %v882 = vadd.f32 %v854, %v878
        %v883 = vadd.f32 %v855, %v879
        %v884 = vadd.f32 %v856, %v880
        %v885 = vadd.f32 %v857, %v881
        %v886 = vsub.f32 %v505, %v798
        %v887 = vsub.f32 %v507, %v799
        %v888 = vsub.f32 %v666, %v800
        %v889 = vsub.f32 %v668, %v801
        %v890 = vmul.f32 %v886, 1.442695
        %v891 = vpow.pop %v890
        %v892 = vmul.f32 %v887, 1.442695
        %v893 = vpow.pop %v892
        %v894 = vmul.f32 %v888, 1.442695
        %v895 = vpow.pop %v894
        %v896 = vmul.f32 %v889, 1.442695
        %v897 = vpow.pop %v896
        %v898 = vadd.f32 %v870, %v891
        %v899 = vadd.f32 %v871, %v893
        %v900 = vadd.f32 %v872, %v895
        %v901 = vadd.f32 %v873, %v897
        %v902 = vld [vmem:[%s316 + $0x60] sm:$0xff]
        %v903 = vld [vmem:[%s316 + $0x68] sm:$0xff]
        %v904 = vld [vmem:[%s316 + $0x70] sm:$0xff]
        %v905 = vld [vmem:[%s316 + $0x78] sm:$0xff]
        %v906 = vmul.f32 %v902, %v891
        %v907 = vmul.f32 %v903, %v893
        %v908 = vmul.f32 %v904, %v895
        %v909 = vmul.f32 %v905, %v897
        %v910 = vadd.f32 %v882, %v906
        %v911 = vadd.f32 %v883, %v907
        %v912 = vadd.f32 %v884, %v908
        %v913 = vadd.f32 %v885, %v909
        %v914 = vsub.f32 %v511, %v798
        %v915 = vsub.f32 %v513, %v799
        %v916 = vsub.f32 %v672, %v800
        %v917 = vsub.f32 %v674, %v801
        %v918 = vmul.f32 %v914, 1.442695
        %v919 = vpow.pop %v918
        %v920 = vmul.f32 %v915, 1.442695
        %v921 = vpow.pop %v920
        %v922 = vmul.f32 %v916, 1.442695
        %v923 = vpow.pop %v922
        %v924 = vmul.f32 %v917, 1.442695
        %v925 = vpow.pop %v924
        %v926 = vadd.f32 %v898, %v919
        %v927 = vadd.f32 %v899, %v921
        %v928 = vadd.f32 %v900, %v923
        %v929 = vadd.f32 %v901, %v925
        %v930 = vld [vmem:[%s316 + $0x80] sm:$0xff]
        %v931 = vld [vmem:[%s316 + $0x88] sm:$0xff]
        %v932 = vld [vmem:[%s316 + $0x90] sm:$0xff]
        %v933 = vld [vmem:[%s316 + $0x98] sm:$0xff]
        %v934 = vmul.f32 %v930, %v919
        %v935 = vmul.f32 %v931, %v921
        %v936 = vmul.f32 %v932, %v923
        %v937 = vmul.f32 %v933, %v925
        %v938 = vadd.f32 %v910, %v934
        %v939 = vadd.f32 %v911, %v935
        %v940 = vadd.f32 %v912, %v936
        %v941 = vadd.f32 %v913, %v937
        %v942 = vsub.f32 %v517, %v798
        %v943 = vsub.f32 %v519, %v799
        %v944 = vsub.f32 %v678, %v800
        %v945 = vsub.f32 %v680, %v801
        %v946 = vmul.f32 %v942, 1.442695
        %v947 = vpow.pop %v946
        %v948 = vmul.f32 %v943, 1.442695
        %v949 = vpow.pop %v948
        %v950 = vmul.f32 %v944, 1.442695
        %v951 = vpow.pop %v950
        %v952 = vmul.f32 %v945, 1.442695
        %v953 = vpow.pop %v952
        %v954 = vadd.f32 %v926, %v947
        %v955 = vadd.f32 %v927, %v949
        %v956 = vadd.f32 %v928, %v951
        %v957 = vadd.f32 %v929, %v953
        %v958 = vld [vmem:[%s316 + $0xa0] sm:$0xff]
        %v959 = vld [vmem:[%s316 + $0xa8] sm:$0xff]
        %v960 = vld [vmem:[%s316 + $0xb0] sm:$0xff]
        %v961 = vld [vmem:[%s316 + $0xb8] sm:$0xff]
        %v962 = vmul.f32 %v958, %v947
        %v963 = vmul.f32 %v959, %v949
        %v964 = vmul.f32 %v960, %v951
        %v965 = vmul.f32 %v961, %v953
        %v966 = vadd.f32 %v938, %v962
        %v967 = vadd.f32 %v939, %v963
        %v968 = vadd.f32 %v940, %v964
        %v969 = vadd.f32 %v941, %v965
        %v970 = vsub.f32 %v523, %v798
        %v971 = vsub.f32 %v525, %v799
        %v972 = vsub.f32 %v684, %v800
        %v973 = vsub.f32 %v686, %v801
        %v974 = vmul.f32 %v970, 1.442695
        %v975 = vpow.pop %v974
        %v976 = vmul.f32 %v971, 1.442695
        %v977 = vpow.pop %v976
        %v978 = vmul.f32 %v972, 1.442695
        %v979 = vpow.pop %v978
        %v980 = vmul.f32 %v973, 1.442695
        %v981 = vpow.pop %v980
        %v982 = vadd.f32 %v954, %v975
        %v983 = vadd.f32 %v955, %v977
        %v984 = vadd.f32 %v956, %v979
        %v985 = vadd.f32 %v957, %v981
        %v986 = vld [vmem:[%s316 + $0xc0] sm:$0xff]
        %v987 = vld [vmem:[%s316 + $0xc8] sm:$0xff]
        %v988 = vld [vmem:[%s316 + $0xd0] sm:$0xff]
        %v989 = vld [vmem:[%s316 + $0xd8] sm:$0xff]
        %v990 = vmul.f32 %v986, %v975
        %v991 = vmul.f32 %v987, %v977
        %v992 = vmul.f32 %v988, %v979
        %v993 = vmul.f32 %v989, %v981
        %v994 = vadd.f32 %v966, %v990
        %v995 = vadd.f32 %v967, %v991
        %v996 = vadd.f32 %v968, %v992
        %v997 = vadd.f32 %v969, %v993
        %v998 = vsub.f32 %v529, %v798
        %v999 = vsub.f32 %v531, %v799
        %v1000 = vsub.f32 %v690, %v800
        %v1001 = vsub.f32 %v692, %v801
        %v1002 = vmul.f32 %v998, 1.442695
        %v1003 = vpow.pop %v1002
        %v1004 = vmul.f32 %v999, 1.442695
        %v1005 = vpow.pop %v1004
        %v1006 = vmul.f32 %v1000, 1.442695
        %v1007 = vpow.pop %v1006
        %v1008 = vmul.f32 %v1001, 1.442695
        %v1009 = vpow.pop %v1008
        %v1010 = vadd.f32 %v982, %v1003
        %v1011 = vadd.f32 %v983, %v1005
        %v1012 = vadd.f32 %v984, %v1007
        %v1013 = vadd.f32 %v985, %v1009
        %v1014 = vld [vmem:[%s316 + $0xe0] sm:$0xff]
        %v1015 = vld [vmem:[%s316 + $0xe8] sm:$0xff]
        %v1016 = vld [vmem:[%s316 + $0xf0] sm:$0xff]
        %v1017 = vld [vmem:[%s316 + $0xf8] sm:$0xff]
        %v1018 = vmul.f32 %v1014, %v1003
        %v1019 = vmul.f32 %v1015, %v1005
        %v1020 = vmul.f32 %v1016, %v1007
        %v1021 = vmul.f32 %v1017, %v1009
        %v1022 = vadd.f32 %v994, %v1018
        %v1023 = vadd.f32 %v995, %v1019
        %v1024 = vadd.f32 %v996, %v1020
        %v1025 = vadd.f32 %v997, %v1021
        %v1026 = vsub.f32 %v535, %v798
        %v1027 = vsub.f32 %v537, %v799
        %v1028 = vsub.f32 %v696, %v800
        %v1029 = vsub.f32 %v698, %v801
        %v1030 = vmul.f32 %v1026, 1.442695
        %v1031 = vpow.pop %v1030
        %v1032 = vmul.f32 %v1027, 1.442695
        %v1033 = vpow.pop %v1032
        %v1034 = vmul.f32 %v1028, 1.442695
        %v1035 = vpow.pop %v1034
        %v1036 = vmul.f32 %v1029, 1.442695
        %v1037 = vpow.pop %v1036
        %v1038 = vadd.f32 %v1010, %v1031
        %v1039 = vadd.f32 %v1011, %v1033
        %v1040 = vadd.f32 %v1012, %v1035
        %v1041 = vadd.f32 %v1013, %v1037
        %v1042 = vld [vmem:[%s316 + $0x100] sm:$0xff]
        %v1043 = vld [vmem:[%s316 + $0x108] sm:$0xff]
        %v1044 = vld [vmem:[%s316 + $0x110] sm:$0xff]
        %v1045 = vld [vmem:[%s316 + $0x118] sm:$0xff]
        %v1046 = vmul.f32 %v1042, %v1031
        %v1047 = vmul.f32 %v1043, %v1033
        %v1048 = vmul.f32 %v1044, %v1035
        %v1049 = vmul.f32 %v1045, %v1037
        %v1050 = vadd.f32 %v1022, %v1046
        %v1051 = vadd.f32 %v1023, %v1047
        %v1052 = vadd.f32 %v1024, %v1048
        %v1053 = vadd.f32 %v1025, %v1049
        %v1054 = vsub.f32 %v541, %v798
        %v1055 = vsub.f32 %v543, %v799
        %v1056 = vsub.f32 %v702, %v800
        %v1057 = vsub.f32 %v704, %v801
        %v1058 = vmul.f32 %v1054, 1.442695
        %v1059 = vpow.pop %v1058
        %v1060 = vmul.f32 %v1055, 1.442695
        %v1061 = vpow.pop %v1060
        %v1062 = vmul.f32 %v1056, 1.442695
        %v1063 = vpow.pop %v1062
        %v1064 = vmul.f32 %v1057, 1.442695
        %v1065 = vpow.pop %v1064
        %v1066 = vadd.f32 %v1038, %v1059
        %v1067 = vadd.f32 %v1039, %v1061
        %v1068 = vadd.f32 %v1040, %v1063
        %v1069 = vadd.f32 %v1041, %v1065
        %v1070 = vld [vmem:[%s316 + $0x120] sm:$0xff]
        %v1071 = vld [vmem:[%s316 + $0x128] sm:$0xff]
        %v1072 = vld [vmem:[%s316 + $0x130] sm:$0xff]
        %v1073 = vld [vmem:[%s316 + $0x138] sm:$0xff]
        %v1074 = vmul.f32 %v1070, %v1059
        %v1075 = vmul.f32 %v1071, %v1061
        %v1076 = vmul.f32 %v1072, %v1063
        %v1077 = vmul.f32 %v1073, %v1065
        %v1078 = vadd.f32 %v1050, %v1074
        %v1079 = vadd.f32 %v1051, %v1075
        %v1080 = vadd.f32 %v1052, %v1076
        %v1081 = vadd.f32 %v1053, %v1077
        %v1082 = vsub.f32 %v547, %v798
        %v1083 = vsub.f32 %v549, %v799
        %v1084 = vsub.f32 %v708, %v800
        %v1085 = vsub.f32 %v710, %v801
        %v1086 = vmul.f32 %v1082, 1.442695
        %v1087 = vpow.pop %v1086
        %v1088 = vmul.f32 %v1083, 1.442695
        %v1089 = vpow.pop %v1088
        %v1090 = vmul.f32 %v1084, 1.442695
        %v1091 = vpow.pop %v1090
        %v1092 = vmul.f32 %v1085, 1.442695
        %v1093 = vpow.pop %v1092
        %v1094 = vadd.f32 %v1066, %v1087
        %v1095 = vadd.f32 %v1067, %v1089
        %v1096 = vadd.f32 %v1068, %v1091
        %v1097 = vadd.f32 %v1069, %v1093
        %v1098 = vld [vmem:[%s316 + $0x140] sm:$0xff]
        %v1099 = vld [vmem:[%s316 + $0x148] sm:$0xff]
        %v1100 = vld [vmem:[%s316 + $0x150] sm:$0xff]
        %v1101 = vld [vmem:[%s316 + $0x158] sm:$0xff]
        %v1102 = vmul.f32 %v1098, %v1087
        %v1103 = vmul.f32 %v1099, %v1089
        %v1104 = vmul.f32 %v1100, %v1091
        %v1105 = vmul.f32 %v1101, %v1093
        %v1106 = vadd.f32 %v1078, %v1102
        %v1107 = vadd.f32 %v1079, %v1103
        %v1108 = vadd.f32 %v1080, %v1104
        %v1109 = vadd.f32 %v1081, %v1105
        %v1110 = vsub.f32 %v553, %v798
        %v1111 = vsub.f32 %v555, %v799
        %v1112 = vsub.f32 %v714, %v800
        %v1113 = vsub.f32 %v716, %v801
        %v1114 = vmul.f32 %v1110, 1.442695
        %v1115 = vpow.pop %v1114
        %v1116 = vmul.f32 %v1111, 1.442695
        %v1117 = vpow.pop %v1116
        %v1118 = vmul.f32 %v1112, 1.442695
        %v1119 = vpow.pop %v1118
        %v1120 = vmul.f32 %v1113, 1.442695
        %v1121 = vpow.pop %v1120
        %v1122 = vadd.f32 %v1094, %v1115
        %v1123 = vadd.f32 %v1095, %v1117
        %v1124 = vadd.f32 %v1096, %v1119
        %v1125 = vadd.f32 %v1097, %v1121
        %v1126 = vld [vmem:[%s316 + $0x160] sm:$0xff]
        %v1127 = vld [vmem:[%s316 + $0x168] sm:$0xff]
        %v1128 = vld [vmem:[%s316 + $0x170] sm:$0xff]
        %v1129 = vld [vmem:[%s316 + $0x178] sm:$0xff]
        %v1130 = vmul.f32 %v1126, %v1115
        %v1131 = vmul.f32 %v1127, %v1117
        %v1132 = vmul.f32 %v1128, %v1119
        %v1133 = vmul.f32 %v1129, %v1121
        %v1134 = vadd.f32 %v1106, %v1130
        %v1135 = vadd.f32 %v1107, %v1131
        %v1136 = vadd.f32 %v1108, %v1132
        %v1137 = vadd.f32 %v1109, %v1133
        %v1138 = vsub.f32 %v559, %v798
        %v1139 = vsub.f32 %v561, %v799
        %v1140 = vsub.f32 %v720, %v800
        %v1141 = vsub.f32 %v722, %v801
        %v1142 = vmul.f32 %v1138, 1.442695
        %v1143 = vpow.pop %v1142
        %v1144 = vmul.f32 %v1139, 1.442695
        %v1145 = vpow.pop %v1144
        %v1146 = vmul.f32 %v1140, 1.442695
        %v1147 = vpow.pop %v1146
        %v1148 = vmul.f32 %v1141, 1.442695
        %v1149 = vpow.pop %v1148
        %v1150 = vadd.f32 %v1122, %v1143
        %v1151 = vadd.f32 %v1123, %v1145
        %v1152 = vadd.f32 %v1124, %v1147
        %v1153 = vadd.f32 %v1125, %v1149
        %v1154 = vld [vmem:[%s316 + $0x180] sm:$0xff]
        %v1155 = vld [vmem:[%s316 + $0x188] sm:$0xff]
        %v1156 = vld [vmem:[%s316 + $0x190] sm:$0xff]
        %v1157 = vld [vmem:[%s316 + $0x198] sm:$0xff]
        %v1158 = vmul.f32 %v1154, %v1143
        %v1159 = vmul.f32 %v1155, %v1145
        %v1160 = vmul.f32 %v1156, %v1147
        %v1161 = vmul.f32 %v1157, %v1149
        %v1162 = vadd.f32 %v1134, %v1158
        %v1163 = vadd.f32 %v1135, %v1159
        %v1164 = vadd.f32 %v1136, %v1160
        %v1165 = vadd.f32 %v1137, %v1161
        %v1166 = vsub.f32 %v565, %v798
        %v1167 = vsub.f32 %v567, %v799
        %v1168 = vsub.f32 %v726, %v800
        %v1169 = vsub.f32 %v728, %v801
        %v1170 = vmul.f32 %v1166, 1.442695
        %v1171 = vpow.pop %v1170
        %v1172 = vmul.f32 %v1167, 1.442695
        %v1173 = vpow.pop %v1172
        %v1174 = vmul.f32 %v1168, 1.442695
        %v1175 = vpow.pop %v1174
        %v1176 = vmul.f32 %v1169, 1.442695
        %v1177 = vpow.pop %v1176
        %v1178 = vadd.f32 %v1150, %v1171
        %v1179 = vadd.f32 %v1151, %v1173
        %v1180 = vadd.f32 %v1152, %v1175
        %v1181 = vadd.f32 %v1153, %v1177
        %v1182 = vld [vmem:[%s316 + $0x1a0] sm:$0xff]
        %v1183 = vld [vmem:[%s316 + $0x1a8] sm:$0xff]
        %v1184 = vld [vmem:[%s316 + $0x1b0] sm:$0xff]
        %v1185 = vld [vmem:[%s316 + $0x1b8] sm:$0xff]
        %v1186 = vmul.f32 %v1182, %v1171
        %v1187 = vmul.f32 %v1183, %v1173
        %v1188 = vmul.f32 %v1184, %v1175
        %v1189 = vmul.f32 %v1185, %v1177
        %v1190 = vadd.f32 %v1162, %v1186
        %v1191 = vadd.f32 %v1163, %v1187
        %v1192 = vadd.f32 %v1164, %v1188
        %v1193 = vadd.f32 %v1165, %v1189
        %v1194 = vsub.f32 %v571, %v798
        %v1195 = vsub.f32 %v573, %v799
        %v1196 = vsub.f32 %v732, %v800
        %v1197 = vsub.f32 %v734, %v801
        %v1198 = vmul.f32 %v1194, 1.442695
        %v1199 = vpow.pop %v1198
        %v1200 = vmul.f32 %v1195, 1.442695
        %v1201 = vpow.pop %v1200
        %v1202 = vmul.f32 %v1196, 1.442695
        %v1203 = vpow.pop %v1202
        %v1204 = vmul.f32 %v1197, 1.442695
        %v1205 = vpow.pop %v1204
        %v1206 = vadd.f32 %v1178, %v1199
        %v1207 = vadd.f32 %v1179, %v1201
        %v1208 = vadd.f32 %v1180, %v1203
        %v1209 = vadd.f32 %v1181, %v1205
        %v1210 = vld [vmem:[%s316 + $0x1c0] sm:$0xff]
        %v1211 = vld [vmem:[%s316 + $0x1c8] sm:$0xff]
        %v1212 = vld [vmem:[%s316 + $0x1d0] sm:$0xff]
        %v1213 = vld [vmem:[%s316 + $0x1d8] sm:$0xff]
        %v1214 = vmul.f32 %v1210, %v1199
        %v1215 = vmul.f32 %v1211, %v1201
        %v1216 = vmul.f32 %v1212, %v1203
        %v1217 = vmul.f32 %v1213, %v1205
        %v1218 = vadd.f32 %v1190, %v1214
        %v1219 = vadd.f32 %v1191, %v1215
        %v1220 = vadd.f32 %v1192, %v1216
        %v1221 = vadd.f32 %v1193, %v1217
        %v1222 = vsub.f32 %v577, %v798
        %v1223 = vsub.f32 %v579, %v799
        %v1224 = vsub.f32 %v738, %v800
        %v1225 = vsub.f32 %v740, %v801
        %v1226 = vmul.f32 %v1222, 1.442695
        %v1227 = vpow.pop %v1226
        %v1228 = vmul.f32 %v1223, 1.442695
        %v1229 = vpow.pop %v1228
        %v1230 = vmul.f32 %v1224, 1.442695
        %v1231 = vpow.pop %v1230
        %v1232 = vmul.f32 %v1225, 1.442695
        %v1233 = vpow.pop %v1232
        %v1234 = vadd.f32 %v1206, %v1227
        %v1235 = vadd.f32 %v1207, %v1229
        %v1236 = vadd.f32 %v1208, %v1231
        %v1237 = vadd.f32 %v1209, %v1233
        %v1238 = vmul.f32 %v416, %v1227
        %v1239 = vmul.f32 %v417, %v1229
        %v1240 = vmul.f32 %v418, %v1231
        %v1241 = vmul.f32 %v419, %v1233
        %v1242 = vadd.f32 %v1218, %v1238
        %v1243 = vadd.f32 %v1219, %v1239
        %v1244 = vadd.f32 %v1220, %v1240
        %v1245 = vadd.f32 %v1221, %v1241
        %v1246 = vrcp.pop %v1234
        %v1247 = vmul.f32 %v1242, %v1246
        %v1248 = vrcp.pop %v1235
        %v1249 = vmul.f32 %v1243, %v1248
        %v1250 = vrcp.pop %v1236
        %v1251 = vmul.f32 %v1244, %v1250
        %v1252 = vrcp.pop %v1237
        %v1253 = vmul.f32 %v1245, %v1252
        %v1254 = vld [vmem:[%s2] sm:$0xff]
        %v1255 = vld [vmem:[%s2 + $0x8] sm:$0xff]
        %v1256 = vld [vmem:[%s3] sm:$0xff]
        %v1257 = vld [vmem:[%s3 + $0x8] sm:$0xff]
        %1259 = vset.pattern.permute.xlu0 0
        %1260 = vperm.xlu0 %1259, %v1256
        %v1261 = vpop.permute.xlu0 %1260
        %1264 = vset.pattern.permute.xlu0 0
        %1265 = vperm.xlu0 %1264, %v1257
        %v1266 = vpop.permute.xlu0 %1265
        %vm1268 = vcmask 64512
        %v1270 = vsel %vm1268, %v1254, 0
        %v1273 = vsel %vm1268, %v1255, 0
        %1275 = vmatprep.subr.mxu0 %v1249
        %1276 = vmatpush1.msra.mxu0 %v1247
        %1277 = vmatprep.subr.mxu0 0.0
        %1278 = vmatpush1.msra.mxu0 0.0
        %1279 = vmatprep.subr.mxu0 0.0
        %1280 = vmatpush1.msra.mxu0 0.0
        %1281 = vmatprep.subr.mxu0 0.0
        %1282 = vmatpush1.msra.mxu0 0.0
        %1283 = vmatprep.subr.mxu0 0.0
        %1284 = vmatpush1.msra.mxu0 0.0
        %1285 = vmatprep.subr.mxu0 0.0
        %1286 = vmatpush1.msra.mxu0 0.0
        %1287 = vmatprep.subr.mxu0 0.0
        %1288 = vmatpush1.msra.mxu0 0.0
        %1289 = vmatprep.subr.mxu0 0.0
        %1290 = vmatpush1.msra.mxu0 0.0
        %1291 = vmatprep.subr.mxu0 0.0
        %1292 = vmatpush1.msra.mxu0 0.0
        %1293 = vmatprep.subr.mxu0 0.0
        %1294 = vmatpush1.msra.mxu0 0.0
        %1295 = vmatprep.subr.mxu0 0.0
        %1296 = vmatpush1.msra.mxu0 0.0
        %1297 = vmatprep.subr.mxu0 0.0
        %1298 = vmatpush1.msra.mxu0 0.0
        %1299 = vmatprep.subr.mxu0 0.0
        %1300 = vmatpush1.msra.mxu0 0.0
        %1301 = vmatprep.subr.mxu0 0.0
        %1302 = vmatpush1.msra.mxu0 0.0
        %1303 = vmatprep.subr.mxu0 0.0
        %1304 = vmatpush1.msra.mxu0 0.0
        %1305 = vmatprep.subr.mxu0 0.0
        %1306 = vmatpush1.msra.mxu0 0.0
        %1307 = vmatprep.subr.mxu0 0.0
        %1308 = vmatpush1.msra.mxu0 0.0
        %1309 = vmatprep.subr.mxu0 0.0
        %1310 = vmatpush1.msra.mxu0 0.0
        %1311 = vmatprep.subr.mxu0 0.0
        %1312 = vmatpush1.msra.mxu0 0.0
        %1313 = vmatprep.subr.mxu0 0.0
        %1314 = vmatpush1.msra.mxu0 0.0
        %1315 = vmatprep.subr.mxu0 0.0
        %1316 = vmatpush1.msra.mxu0 0.0
        %1317 = vmatprep.subr.mxu0 0.0
        %1318 = vmatpush1.msra.mxu0 0.0
        %1319 = vmatprep.subr.mxu0 0.0
        %1320 = vmatpush1.msra.mxu0 0.0
        %1321 = vmatprep.subr.mxu0 0.0
        %1322 = vmatpush1.msra.mxu0 0.0
        %1323 = vmatprep.subr.mxu0 0.0
        %1324 = vmatpush1.msra.mxu0 0.0
        %1325 = vmatprep.subr.mxu0 0.0
        %1326 = vmatpush1.msra.mxu0 0.0
        %1327 = vmatprep.subr.mxu0 0.0
        %1328 = vmatpush1.msra.mxu0 0.0
        %1329 = vmatprep.subr.mxu0 0.0
        %1330 = vmatpush1.msra.mxu0 0.0
        %1331 = vmatprep.subr.mxu0 0.0
        %1332 = vmatpush1.msra.mxu0 0.0
        %1333 = vmatprep.subr.mxu0 0.0
        %1334 = vmatpush1.msra.mxu0 0.0
        %1335 = vmatprep.subr.mxu0 0.0
        %1336 = vmatpush1.msra.mxu0 0.0
        %1337 = vmatprep.subr.mxu0 0.0
        %1338 = vmatpush1.msra.mxu0 0.0
        %1339 = vmatprep.mubr.f32.mxu0 0.0
        %1340 = vmatmul.mubr.f32.gmra.mrb[0].mxu0 %v1270
        %v1341 = vpop.f32.mrb[0].mxu0
        %v1342 = vadd.f32 %v1261, %v1341
        %v1343 = vpop.f32.mrb[0].mxu0
        %v1344 = vadd.f32 %v1261, %v1343
        %1345 = vmatprep.mubr.f32.mxu0 0.0
        %1346 = vmatmul.mubr.f32.gmra.mrb[0].mxu0 %v1273
        %v1347 = vpop.f32.mrb[0].mxu0
        %v1348 = vadd.f32 %v1266, %v1347
        %v1349 = vpop.f32.mrb[0].mxu0
        %v1350 = vadd.f32 %v1266, %v1349
        %1351 = vdwg.mxu0
        %1352 = vmatprep.subr.mxu0 %v1253
        %1353 = vmatpush1.msra.mxu0 %v1251
        %1354 = vmatprep.subr.mxu0 0.0
        %1355 = vmatpush1.msra.mxu0 0.0
        %1356 = vmatprep.subr.mxu0 0.0
        %1357 = vmatpush1.msra.mxu0 0.0
        %1358 = vmatprep.subr.mxu0 0.0
        %1359 = vmatpush1.msra.mxu0 0.0
        %1360 = vmatprep.subr.mxu0 0.0
        %1361 = vmatpush1.msra.mxu0 0.0
        %1362 = vmatprep.subr.mxu0 0.0
        %1363 = vmatpush1.msra.mxu0 0.0
        %1364 = vmatprep.subr.mxu0 0.0
        %1365 = vmatpush1.msra.mxu0 0.0
        %1366 = vmatprep.subr.mxu0 0.0
        %1367 = vmatpush1.msra.mxu0 0.0
        %1368 = vmatprep.subr.mxu0 0.0
        %1369 = vmatpush1.msra.mxu0 0.0
        %1370 = vmatprep.subr.mxu0 0.0
        %1371 = vmatpush1.msra.mxu0 0.0
        %1372 = vmatprep.subr.mxu0 0.0
        %1373 = vmatpush1.msra.mxu0 0.0
        %1374 = vmatprep.subr.mxu0 0.0
        %1375 = vmatpush1.msra.mxu0 0.0
        %1376 = vmatprep.subr.mxu0 0.0
        %1377 = vmatpush1.msra.mxu0 0.0
        %1378 = vmatprep.subr.mxu0 0.0
        %1379 = vmatpush1.msra.mxu0 0.0
        %1380 = vmatprep.subr.mxu0 0.0
        %1381 = vmatpush1.msra.mxu0 0.0
        %1382 = vmatprep.subr.mxu0 0.0
        %1383 = vmatpush1.msra.mxu0 0.0
        %1384 = vmatprep.subr.mxu0 0.0
        %1385 = vmatpush1.msra.mxu0 0.0
        %1386 = vmatprep.subr.mxu0 0.0
        %1387 = vmatpush1.msra.mxu0 0.0
        %1388 = vmatprep.subr.mxu0 0.0
        %1389 = vmatpush1.msra.mxu0 0.0
        %1390 = vmatprep.subr.mxu0 0.0
        %1391 = vmatpush1.msra.mxu0 0.0
        %1392 = vmatprep.subr.mxu0 0.0
        %1393 = vmatpush1.msra.mxu0 0.0
        %1394 = vmatprep.subr.mxu0 0.0
        %1395 = vmatpush1.msra.mxu0 0.0
        %1396 = vmatprep.subr.mxu0 0.0
        %1397 = vmatpush1.msra.mxu0 0.0
        %1398 = vmatprep.subr.mxu0 0.0
        %1399 = vmatpush1.msra.mxu0 0.0
        %1400 = vmatprep.subr.mxu0 0.0
        %1401 = vmatpush1.msra.mxu0 0.0
        %1402 = vmatprep.subr.mxu0 0.0
        %1403 = vmatpush1.msra.mxu0 0.0
        %1404 = vmatprep.subr.mxu0 0.0
        %1405 = vmatpush1.msra.mxu0 0.0
        %1406 = vmatprep.subr.mxu0 0.0
        %1407 = vmatpush1.msra.mxu0 0.0
        %1408 = vmatprep.subr.mxu0 0.0
        %1409 = vmatpush1.msra.mxu0 0.0
        %1410 = vmatprep.subr.mxu0 0.0
        %1411 = vmatpush1.msra.mxu0 0.0
        %1412 = vmatprep.subr.mxu0 0.0
        %1413 = vmatpush1.msra.mxu0 0.0
        %1414 = vmatprep.subr.mxu0 0.0
        %1415 = vmatpush1.msra.mxu0 0.0
        %1416 = vmatprep.mubr.f32.mxu0 0.0
        %1417 = vmatmul.mubr.f32.gmra.mrb[0].mxu0 %v1270
        %v1418 = vpop.f32.mrb[0].mxu0
        %v1419 = vadd.f32 %v1261, %v1418
        %v1420 = vpop.f32.mrb[0].mxu0
        %v1421 = vadd.f32 %v1261, %v1420
        %1422 = vmatprep.mubr.f32.mxu0 0.0
        %1423 = vmatmul.mubr.f32.gmra.mrb[0].mxu0 %v1273
        %v1424 = vpop.f32.mrb[0].mxu0
        %v1425 = vadd.f32 %v1266, %v1424
        %v1426 = vpop.f32.mrb[0].mxu0
        %v1427 = vadd.f32 %v1266, %v1426
        %1428 = vdwg.mxu0
        %vm1429 = vcmp.ge.f32.partialorder %v1342, 0.0
        %vm1430 = vcmp.ge.f32.partialorder %v1344, 0.0
        %vm1431 = vcmp.ge.f32.partialorder %v1419, 0.0
        %vm1432 = vcmp.ge.f32.partialorder %v1421, 0.0
        %vm1433 = vcmp.ge.f32.partialorder %v1348, 0.0
        %vm1434 = vcmp.ge.f32.partialorder %v1350, 0.0
        %vm1435 = vcmp.ge.f32.partialorder %v1425, 0.0
        %vm1436 = vcmp.ge.f32.partialorder %v1427, 0.0
        %v1437 = vmul.f32 %v1342, 0.2
        %v1438 = vmul.f32 %v1344, 0.2
        %v1439 = vmul.f32 %v1419, 0.2
        %v1440 = vmul.f32 %v1421, 0.2
        %v1441 = vmul.f32 %v1348, 0.2
        %v1442 = vmul.f32 %v1350, 0.2
        %v1443 = vmul.f32 %v1425, 0.2
        %v1444 = vmul.f32 %v1427, 0.2
        %v1445 = vsel %vm1429, %v1342, %v1437
        %v1446 = vsel %vm1430, %v1344, %v1438
        %v1447 = vsel %vm1431, %v1419, %v1439
        %v1448 = vsel %vm1432, %v1421, %v1440
        %v1449 = vsel %vm1433, %v1348, %v1441
        %v1450 = vsel %vm1434, %v1350, %v1442
        %v1451 = vsel %vm1435, %v1425, %v1443
        %v1452 = vsel %vm1436, %v1427, %v1444
        %1453 = vst [vmem:[%s337] sm:$0xff] %v1445
        %1454 = vst [vmem:[%s337 + $0x8] sm:$0xff] %v1446
        %1455 = vst [vmem:[%s337 + $0x10] sm:$0xff] %v1447
        %1456 = vst [vmem:[%s337 + $0x18] sm:$0xff] %v1448
        %1457 = vst [vmem:[%s337 + $0x20] sm:$0xff] %v1449
        %1458 = vst [vmem:[%s337 + $0x28] sm:$0xff] %v1450
        %1459 = vst [vmem:[%s337 + $0x30] sm:$0xff] %v1451
        %1460 = vst [vmem:[%s337 + $0x38] sm:$0xff] %v1452
        %s1461 = sand.u32 %s112, 1
        %s1462 = sand.u32 %s112, 1
        %s1463 = smul.addr %s1462, 64
        %s1464 = scalar_lea.vmem [#allocation3], %s1463
        // Predicated region
        $region60: #{gt_pooling_forward.1} parent=54 // pred_check
          %p1465 = pneg %p122
        $region61: #{gt_pooling_forward.1} parent=54 // pred_check_branch
          %1467 = sbr.rel (%p1465) target = $region63
        $region62: #{gt_pooling_forward.1} parent=54 // pred_region
          %s1468 = smul.u32 4, %s15
          %s1469 = smul.addr %s1468, 8
          %s1470 = scalar_lea.vmem %s4, %s1469
          // Predicated region
          $region64: #{gt_pooling_forward.1} parent=62 // pred_check
            _
          $region65: #{gt_pooling_forward.1} parent=62 // pred_check_branch
            %1472 = sbr.rel (0) target = $region67
          $region66: #{gt_pooling_forward.1} parent=62 // pred_region
            // Predicated region
            $region68: #{gt_pooling_forward.1} parent=66 // pred_check
              _
            $region69: #{gt_pooling_forward.1} parent=66 // pred_check_branch
              %1474 = sbr.rel (0) target = $region71
            $region70: #{gt_pooling_forward.1} parent=66 // pred_region
              loop: start=0, step=1, limit=1
              $region72: #{gt_pooling_forward.1} parent=70 // loop_pre_header
                _
              $region73: #{gt_pooling_forward.1} parent=70 // loop_header
                %s1476 = sphi 0, %s1480
                %p1477 = scmp.ge.s32.totalorder %s1476, 1
                %s1481 = sphi %s1464, %s1464
                %s1482 = sphi %s1470, %s1470
              $region74: #{gt_pooling_forward.1} parent=70 // loop_header_branch
                %1479 = sbr.rel (%p1477) target = $region78
              $region75: #{gt_pooling_forward.1} parent=70 // loop_body
                %v1483 = vld [vmem:[%s1481] sm:$0xff]
                %1484 = vst [vmem:[%s1482] sm:$0xff] %v1483
                %v1485 = vld [vmem:[%s1481 + $0x8] sm:$0xff]
                %1486 = vst [vmem:[%s1482 + $0x8] sm:$0xff] %v1485
                %v1487 = vld [vmem:[%s1481 + $0x10] sm:$0xff]
                %1488 = vst [vmem:[%s1482 + $0x10] sm:$0xff] %v1487
                %v1489 = vld [vmem:[%s1481 + $0x18] sm:$0xff]
                %1490 = vst [vmem:[%s1482 + $0x18] sm:$0xff] %v1489
                %v1491 = vld [vmem:[%s1481 + $0x20] sm:$0xff]
                %1492 = vst [vmem:[%s1482 + $0x40] sm:$0xff] %v1491
                %v1493 = vld [vmem:[%s1481 + $0x28] sm:$0xff]
                %1494 = vst [vmem:[%s1482 + $0x48] sm:$0xff] %v1493
                %v1495 = vld [vmem:[%s1481 + $0x30] sm:$0xff]
                %1496 = vst [vmem:[%s1482 + $0x50] sm:$0xff] %v1495
                %v1497 = vld [vmem:[%s1481 + $0x38] sm:$0xff]
                %1498 = vst [vmem:[%s1482 + $0x58] sm:$0xff] %v1497
              $region76: #{gt_pooling_forward.1} parent=70 // loop_footer
                %s1480 = sadd.s32 1, %s1476
              $region77: #{gt_pooling_forward.1} parent=70 // loop_footer_branch
                %1475 = sbr.rel target = $region73
              $region78: #{gt_pooling_forward.1} parent=70 // loop_exit
                _
            $region71: #{gt_pooling_forward.1} parent=66 // pred_fallthru
              _
            // Predicated region
            $region79: #{gt_pooling_forward.1} parent=66 // pred_check
              _
            $region80: #{gt_pooling_forward.1} parent=66 // pred_check_branch
              %1500 = sbr.rel target = $region82
            $region81: #{gt_pooling_forward.1} parent=66 // pred_region
              _
            $region82: #{gt_pooling_forward.1} parent=66 // pred_fallthru
              _
          $region67: #{gt_pooling_forward.1} parent=62 // pred_fallthru
            _
          %1501 = vnop
        $region63: #{gt_pooling_forward.1} parent=54 // pred_fallthru
          _
      $region55: #{gt_pooling_forward.1} parent=5 // pred_fallthru
        _
      %p1502 = scmp.le.s32.totalorder 2, %s10
      // Predicated region
      $region83: #{gt_pooling_forward.1} parent=5 // pred_check
        %p1503 = pneg %p1502
      $region84: #{gt_pooling_forward.1} parent=5 // pred_check_branch
        %1505 = sbr.rel (%p1503) target = $region86
      $region85: #{gt_pooling_forward.1} parent=5 // pred_region
        %s1506 = ssub.s32 %s10, 2
        // Predicated region
        $region87: #{gt_pooling_forward.1} parent=85 // pred_check
          %p1507 = pneg %p128
        $region88: #{gt_pooling_forward.1} parent=85 // pred_check_branch
          %1509 = sbr.rel (%p1507) target = $region90
        $region89: #{gt_pooling_forward.1} parent=85 // pred_region
          %s1510 = sand.u32 %s113, 1
          %s1511 = sand.u32 %s113, 1
          %s1512 = smul.addr %s1511, 64
          %s1513 = scalar_lea.vmem [#allocation3], %s1512
        $region90: #{gt_pooling_forward.1} parent=85 // pred_fallthru
          _
      $region86: #{gt_pooling_forward.1} parent=5 // pred_fallthru
        _
    $region6: #{gt_pooling_forward.1} parent=1 // loop_footer
      %s14 = sadd.s32 1, %s10
    $region7: #{gt_pooling_forward.1} parent=1 // loop_footer_branch
      %9 = sbr.rel target = $region3
    $region8: #{gt_pooling_forward.1} parent=1 // loop_exit
      _

</llo_original>
